<compile_context>
chip_gen: v7x
topology: tpu7x:2x2x1
jax: 0.10.0
libtpu: 0.0.40
codegen_flags: <defaults>
</compile_context>

<pallas_src>
import functools

import jax
import jax.numpy as jnp
import numpy as np
from jax import lax
from jax.experimental import pallas as pl
from jax.experimental.pallas import tpu as pltpu

TEMPERATURE = 0.07


def _l2_normalize(x):
    # F.normalize(x): x / max(||x||_2, eps), eps = 1e-12 (zero rows stay zero).
    x = x.astype(jnp.float32)
    n = jnp.sqrt(jnp.sum(x * x, axis=-1, keepdims=True))
    return x / jnp.maximum(n, 1e-12)


def _vmem_config():
    """Per-generation tile budget + scoped-VMEM limit (bytes)."""
    try:
        cap = int(pltpu.get_tpu_info().vmem_capacity_bytes)
    except Exception:  # conservative (v7x-sized) fallback
        cap = 64 * 1024 * 1024
    budget = max(12 << 20, min(int(cap * 0.40), 40 << 20))
    limit = max(32 << 20, min(int(cap * 0.70), 56 << 20))
    return budget, max(limit, budget + (4 << 20))


def _vmem_estimate(bq, bk, d):
    """Rough per-step VMEM footprint (bytes) of the fused kernel."""
    f32 = 4
    tiles_in = 2 * (2 * bq * d + 2 * bk * d) * f32   # double-buffered q/k tiles
    tiles_out = 2 * (2 * bq + bk) * f32              # double-buffered out tiles
    interm = 6 * bk * bq * f32                       # 3 exp'd sim tiles + temps
    scratch = 2 * bq * f32
    return tiles_in + tiles_out + interm + scratch


def _choose_tiles(n_pad, d, budget):
    """Pick (bq, bk).

    bq: largest of (512, 256, 128) dividing n_pad that still leaves >= 2 query
        blocks, so the 'parallel' grid axis can shard across both TensorCores
        on v7x (and output stores stay >= 128 lanes wide).
    bk: largest 128-multiple candidate dividing n_pad whose footprint fits the
        per-generation VMEM budget.
    """
    bq = 128
    for c in (512, 256):
        if n_pad % c == 0 and n_pad // c >= 2:
            bq = c
            break
    bk = 128
    for c in (2048, 1024, 512, 256, 128):
        if n_pad % c == 0 and _vmem_estimate(bq, c, d) <= budget:
            bk = c
            break
    return bq, bk


def _fused_loss_kernel(z1q_ref, z2q_ref, z1k_ref, z2k_ref,
                       l1_out_ref, l2refl_out_ref, l2btwn_out_ref,
                       l1_acc, l2_acc, *, inv_t):
    """One (query-block i, key-block j) step of BOTH loss directions.

    Inputs are L2-normalized (and zero-padded) embeddings.  Similarity tiles
    are oriented (bk, bq): rows = keys (sublanes), cols = queries (lanes), so
    the per-query accumulators are lane-dense (1, bq) vectors.
    """
    i = pl.program_id(0)
    j = pl.program_id(1)
    bq = z1q_ref.shape[0]
    bk = z1k_ref.shape[0]

    @pl.when(j == 0)
    def _init():
        l1_acc[...] = jnp.zeros_like(l1_acc)
        l2_acc[...] = jnp.zeros_like(l2_acc)

    it = jnp.float32(inv_t)
    z1q = z1q_ref[...]          # (bq, D) queries, z1
    z2q = z2q_ref[...]          # (bq, D) queries, z2
    z1k = z1k_ref[...]          # (bk, D) keys,    z1
    z2k = z2k_ref[...]          # (bk, D) keys,    z2

    # Contract the last dim of both operands (no explicit transposes).
    dn = (((1,), (1,)), ((), ()))
    a = jnp.exp(lax.dot_general(z1k, z1q, dn,
                                preferred_element_type=jnp.float32) * it)  # refl dir-1
    b = jnp.exp(lax.dot_general(z2k, z2q, dn,
                                preferred_element_type=jnp.float32) * it)  # refl dir-2
    c = jnp.exp(lax.dot_general(z2k, z1q, dn,
                                preferred_element_type=jnp.float32) * it)  # between (shared)

    # Row sums over the key (sublane) axis -> lane-dense (1, bq).
    l1_acc[...] += jnp.sum(a + c, axis=0, keepdims=True)
    l2_acc[...] += jnp.sum(b, axis=0, keepdims=True)

    # Column sums of the shared between tile = direction-2 "between" row sums
    # for the z2 rows in key block j; reduced over i in plain JAX afterwards.
    l2btwn_out_ref[...] = jnp.sum(c, axis=1, keepdims=True).reshape(1, 1, bk, 1)

    # Exclude the reflexive diagonals.  Only the key tile whose column range
    # overlaps this query tile can hold diagonal elements, so the iota/mask
    # work is gated to that single tile per query block.  Extracting the diag
    # from the SAME exp'd tiles that were summed keeps the (huge-diag) sum -
    # diag cancellation bit-consistent with the reference.
    q_lo = i * bq
    k_lo = j * bk

    @pl.when(jnp.logical_and(k_lo < q_lo + bq, k_lo + bk > q_lo))
    def _diag():
        key_ids = k_lo + lax.broadcasted_iota(jnp.int32, (bk, bq), 0)
        qry_ids = q_lo + lax.broadcasted_iota(jnp.int32, (bk, bq), 1)
        dmask = (key_ids == qry_ids).astype(jnp.float32)
        l1_acc[...] -= jnp.sum(a * dmask, axis=0, keepdims=True)
        l2_acc[...] -= jnp.sum(b * dmask, axis=0, keepdims=True)

    @pl.when(j == pl.num_programs(1) - 1)
    def _finalize():
        l1_out_ref[...] = l1_acc[...][None]
        l2refl_out_ref[...] = l2_acc[...][None]


def _fused_denominators(z1p, z2p, *, temperature, bq, bk, vmem_limit):
    """Run the fused kernel on already-normalized, padded (n_pad, D) inputs."""
    n_pad, d = z1p.shape
    nq, nk = n_pad // bq, n_pad // bk
    kernel = functools.partial(_fused_loss_kernel, inv_t=1.0 / temperature)

    l1_part, l2_refl, l2_btwn_part = pl.pallas_call(
        kernel,
        out_shape=(
            jax.ShapeDtypeStruct((nq, 1, bq), jnp.float32),     # dir-1 denom (minus diag)
            jax.ShapeDtypeStruct((nq, 1, bq), jnp.float32),     # dir-2 refl part (minus diag)
            jax.ShapeDtypeStruct((nq, nk, bk, 1), jnp.float32), # dir-2 between partial colsums
        ),
        grid_spec=pltpu.PrefetchScalarGridSpec(
            num_scalar_prefetch=0,
            grid=(nq, nk),
            in_specs=[
                pl.BlockSpec((bq, d), lambda i, j: (i, 0)),     # z1 query tile
                pl.BlockSpec((bq, d), lambda i, j: (i, 0)),     # z2 query tile
                pl.BlockSpec((bk, d), lambda i, j: (j, 0)),     # z1 key tile
                pl.BlockSpec((bk, d), lambda i, j: (j, 0)),     # z2 key tile
            ],
            out_specs=[
                pl.BlockSpec((1, 1, bq), lambda i, j: (i, 0, 0)),
                pl.BlockSpec((1, 1, bq), lambda i, j: (i, 0, 0)),
                pl.BlockSpec((1, 1, bk, 1), lambda i, j: (i, j, 0, 0)),
            ],
            scratch_shapes=[pltpu.VMEM((1, bq), jnp.float32)] * 2,
        ),
        compiler_params=pltpu.CompilerParams(
            dimension_semantics=("parallel", "arbitrary"),
            vmem_limit_bytes=vmem_limit),
    )(z1p, z2p, z1p, z2p)
    return l1_part, l2_refl, l2_btwn_part


def contrastive_loss(h1, h2, *, temperature=TEMPERATURE, mean=True,
                     batch_size=None, bq=None, bk=None):
    """(semi_loss(h1,h2) + semi_loss(h2,h1)) * 0.5, then mean()/sum().

    `batch_size` (torch's batched_semi_loss) is accepted for API parity but
    ignored: the kernel's (query-block x key-block) tiling subsumes it.
    """
    del batch_size
    n, d = h1.shape
    z1n = _l2_normalize(h1)
    z2n = _l2_normalize(h2)

    # Pad the node axis to a multiple of 128 with zero rows.  exp(0)=1 exactly,
    # so each padded row adds exactly 1.0 to every accumulated sum; this is
    # subtracted back out below (exact correction, no in-kernel masking).
    n_pad = max(128, ((n + 127) // 128) * 128)
    extra = n_pad - n
    if extra:
        z1p = jnp.pad(z1n, ((0, extra), (0, 0)))
        z2p = jnp.pad(z2n, ((0, extra), (0, 0)))
    else:
        z1p, z2p = z1n, z2n

    budget, vmem_limit = _vmem_config()
    auto_bq, auto_bk = _choose_tiles(n_pad, d, budget)
    bq = auto_bq if bq is None else bq
    bk = auto_bk if bk is None else bk
    assert n_pad % bq == 0 and n_pad % bk == 0, (n_pad, bq, bk)

    l1_part, l2_refl, l2_btwn_part = _fused_denominators(
        z1p, z2p, temperature=temperature, bq=bq, bk=bk, vmem_limit=vmem_limit)

    l1_part = l1_part.reshape(n_pad)[:n]
    l2_refl = l2_refl.reshape(n_pad)[:n]
    # Reduce the (nq, nk, bk) partial column sums over the query-block axis.
    l2_btwn = jnp.sum(l2_btwn_part[..., 0], axis=0).reshape(n_pad)[:n]

    pad_f = jnp.float32(extra)
    denom1 = l1_part - 2.0 * pad_f                 # refl1(no diag) + between row sums
    denom2 = (l2_refl - pad_f) + (l2_btwn - pad_f)

    # Numerator exp(<z1_i, z2_i>/t): O(N*D) row-wise dot in plain JAX (replaces
    # the masked in-kernel diagonal extraction of the between tile).
    numer = jnp.exp(jnp.sum(z1n * z2n, axis=-1) / temperature)

    l1 = -jnp.log(numer / denom1)
    l2 = -jnp.log(numer / denom2)
    ret = (l1 + l2) * 0.5
    return jnp.mean(ret) if mean else jnp.sum(ret)


# ----- pure-JAX reference (for correctness check) -----
def _ref_semi_loss(z1, z2, temperature):
    z1n, z2n = _l2_normalize(z1), _l2_normalize(z2)
    hp = lax.Precision.HIGHEST
    refl = jnp.exp(jnp.dot(z1n, z1n.T, precision=hp) / temperature)
    btwn = jnp.exp(jnp.dot(z1n, z2n.T, precision=hp) / temperature)
    return -jnp.log(jnp.diag(btwn) /
                    (refl.sum(1) + btwn.sum(1) - jnp.diag(refl)))


def _ref_contrastive_loss(h1, h2, temperature):
    l1 = _ref_semi_loss(h1, h2, temperature)
    l2 = _ref_semi_loss(h2, h1, temperature)
    return jnp.mean((l1 + l2) * 0.5)


if __name__ == "__main__":
    key = jax.random.PRNGKey(0)
    k1, k2, k3, k4 = jax.random.split(key, 4)
    N, D = 256, 64          # small: 256 nodes, 64-dim embeddings
    h1 = jax.random.normal(k1, (N, D), dtype=jnp.float32)
    h2 = jax.random.normal(k2, (N, D), dtype=jnp.float32)

    ref = jax.block_until_ready(_ref_contrastive_loss(h1, h2, TEMPERATURE))

    # Auto tiles: bq=128 (>=2 parallel blocks for v7x megacore), bk=256.
    loss = jax.block_until_ready(contrastive_loss(h1, h2))
    np.testing.assert_allclose(np.asarray(loss), np.asarray(ref),
                               rtol=1e-4, atol=1e-5)

    # Small square tiles: exercises the multi-key-block reduction, the gated
    # diagonal exclusion and the cross-block partial-column-sum path.
    loss_tiled = jax.block_until_ready(contrastive_loss(h1, h2, bq=128, bk=128))
    np.testing.assert_allclose(np.asarray(loss_tiled), np.asarray(ref),
                               rtol=1e-4, atol=1e-5)

    # N not divisible by 128: exercises the pad-and-exact-correct path.
    N2 = 200
    h1b = jax.random.normal(k3, (N2, D), dtype=jnp.float32)
    h2b = jax.random.normal(k4, (N2, D), dtype=jnp.float32)
    ref_b = jax.block_until_ready(_ref_contrastive_loss(h1b, h2b, TEMPERATURE))
    loss_b = jax.block_until_ready(contrastive_loss(h1b, h2b))
    np.testing.assert_allclose(np.asarray(loss_b), np.asarray(ref_b),
                               rtol=1e-4, atol=1e-5)

    # sum-reduction path (mean=False).
    ref_sum = jax.block_until_ready(
        jnp.sum(0.5 * (_ref_semi_loss(h1, h2, TEMPERATURE)
                       + _ref_semi_loss(h2, h1, TEMPERATURE))))
    loss_sum = jax.block_until_ready(contrastive_loss(h1, h2, mean=False))
    np.testing.assert_allclose(np.asarray(loss_sum), np.asarray(ref_sum),
                               rtol=1e-4, atol=1e-3)

    print("KERNEL_OK")
</pallas_src>

<mosaic_0001>
module attributes {stable_mosaic.version = 11 : i64} {
  func.func @_fused_loss_kernel(%arg0: i32, %arg1: i32, %arg2: memref<128x64xf32, #tpu.memory_space<vmem>>, %arg3: memref<128x64xf32, #tpu.memory_space<vmem>>, %arg4: memref<256x64xf32, #tpu.memory_space<vmem>>, %arg5: memref<256x64xf32, #tpu.memory_space<vmem>>, %arg6: memref<1x1x128xf32, #tpu.memory_space<vmem>>, %arg7: memref<1x1x128xf32, #tpu.memory_space<vmem>>, %arg8: memref<1x1x256x1xf32, #tpu.memory_space<vmem>>, %arg9: memref<1x128xf32, #tpu.memory_space<vmem>>, %arg10: memref<1x128xf32, #tpu.memory_space<vmem>>) attributes {dimension_semantics = [#tpu.dimension_semantics<parallel>, #tpu.dimension_semantics<arbitrary>], iteration_bounds = array<i64: 2, 1>, scalar_prefetch = 0 : i64, scratch_operands = 2 : i64, tpu.core_type = #tpu.core_type<tc>, window_params = [{transform_indices = @transform_0, window_bounds = array<i64: 128, 64>}, {transform_indices = @transform_1, window_bounds = array<i64: 128, 64>}, {transform_indices = @transform_2, window_bounds = array<i64: 256, 64>}, {transform_indices = @transform_3, window_bounds = array<i64: 256, 64>}, {transform_indices = @transform_4, window_bounds = array<i64: 1, 1, 128>}, {transform_indices = @transform_5, window_bounds = array<i64: 1, 1, 128>}, {transform_indices = @transform_6, window_bounds = array<i64: 1, 1, 256, 1>}]} {
    %c0_i32 = arith.constant 0 : i32
    %0 = arith.cmpi eq, %arg1, %c0_i32 : i32
    %1 = arith.extui %0 : i1 to i32
    %c0_i32_0 = arith.constant 0 : i32
    %2 = arith.cmpi ne, %1, %c0_i32_0 : i32
    scf.if %2 {
      %cst_33 = arith.constant 0.000000e+00 : f32
      %46 = vector.broadcast %cst_33 : f32 to vector<1x128xf32>
      %c0_34 = arith.constant 0 : index
      %c0_35 = arith.constant 0 : index
      %47 = vector.load %arg9[%c0_34, %c0_35] : memref<1x128xf32, #tpu.memory_space<vmem>>, vector<1x128xf32>
      tpu.vector_store %arg9[%c0_34, %c0_35], %46 {strides = array<i32>} : memref<1x128xf32, #tpu.memory_space<vmem>>, vector<1x128xf32>,
      %cst_36 = arith.constant 0.000000e+00 : f32
      %48 = vector.broadcast %cst_36 : f32 to vector<1x128xf32>
      %c0_37 = arith.constant 0 : index
      %c0_38 = arith.constant 0 : index
      %49 = vector.load %arg10[%c0_37, %c0_38] : memref<1x128xf32, #tpu.memory_space<vmem>>, vector<1x128xf32>
      tpu.vector_store %arg10[%c0_37, %c0_38], %48 {strides = array<i32>} : memref<1x128xf32, #tpu.memory_space<vmem>>, vector<1x128xf32>,
    } else {
    }
    %c0 = arith.constant 0 : index
    %c0_1 = arith.constant 0 : index
    %3 = vector.load %arg2[%c0, %c0_1] : memref<128x64xf32, #tpu.memory_space<vmem>>, vector<128x64xf32>
    %c0_2 = arith.constant 0 : index
    %c0_3 = arith.constant 0 : index
    %4 = vector.load %arg3[%c0_2, %c0_3] : memref<128x64xf32, #tpu.memory_space<vmem>>, vector<128x64xf32>
    %c0_4 = arith.constant 0 : index
    %c0_5 = arith.constant 0 : index
    %5 = vector.load %arg4[%c0_4, %c0_5] : memref<256x64xf32, #tpu.memory_space<vmem>>, vector<256x64xf32>
    %c0_6 = arith.constant 0 : index
    %c0_7 = arith.constant 0 : index
    %6 = vector.load %arg5[%c0_6, %c0_7] : memref<256x64xf32, #tpu.memory_space<vmem>>, vector<256x64xf32>
    %cst = arith.constant dense<0.000000e+00> : vector<256x128xf32>
    %7 = tpu.matmul %5, %3, %cst {dimension_numbers = #tpu.dot_dimension_numbers<[1], [1], [0], [0], [0, 0, 1, 0], [], []>} : vector<256x64xf32>, vector<128x64xf32>, vector<256x128xf32> -> vector<256x128xf32>
    %cst_8 = arith.constant 14.2857141 : f32
    %8 = vector.broadcast %cst_8 : f32 to vector<256x128xf32>
    %9 = arith.mulf %7, %8 : vector<256x128xf32>
    %10 = math.exp %9 : vector<256x128xf32>
    %cst_9 = arith.constant dense<0.000000e+00> : vector<256x128xf32>
    %11 = tpu.matmul %6, %4, %cst_9 {dimension_numbers = #tpu.dot_dimension_numbers<[1], [1], [0], [0], [0, 0, 1, 0], [], []>} : vector<256x64xf32>, vector<128x64xf32>, vector<256x128xf32> -> vector<256x128xf32>
    %cst_10 = arith.constant 14.2857141 : f32
    %12 = vector.broadcast %cst_10 : f32 to vector<256x128xf32>
    %13 = arith.mulf %11, %12 : vector<256x128xf32>
    %14 = math.exp %13 : vector<256x128xf32>
    %cst_11 = arith.constant dense<0.000000e+00> : vector<256x128xf32>
    %15 = tpu.matmul %6, %3, %cst_11 {dimension_numbers = #tpu.dot_dimension_numbers<[1], [1], [0], [0], [0, 0, 1, 0], [], []>} : vector<256x64xf32>, vector<128x64xf32>, vector<256x128xf32> -> vector<256x128xf32>
    %cst_12 = arith.constant 14.2857141 : f32
    %16 = vector.broadcast %cst_12 : f32 to vector<256x128xf32>
    %17 = arith.mulf %15, %16 : vector<256x128xf32>
    %18 = math.exp %17 : vector<256x128xf32>
    %c0_13 = arith.constant 0 : index
    %c0_14 = arith.constant 0 : index
    %19 = vector.load %arg9[%c0_13, %c0_14] : memref<1x128xf32, #tpu.memory_space<vmem>>, vector<1x128xf32>
    %20 = arith.addf %10, %18 : vector<256x128xf32>
    %cst_15 = arith.constant dense<0.000000e+00> : vector<128xf32>
    %21 = vector.multi_reduction <add>, %20, %cst_15 [0] : vector<256x128xf32> to vector<128xf32>
    %22 = vector.shape_cast %21 : vector<128xf32> to vector<1x128xf32>
    %23 = arith.addf %19, %22 : vector<1x128xf32>
    %c0_16 = arith.constant 0 : index
    %c0_17 = arith.constant 0 : index
    %24 = vector.load %arg9[%c0_16, %c0_17] : memref<1x128xf32, #tpu.memory_space<vmem>>, vector<1x128xf32>
    tpu.vector_store %arg9[%c0_16, %c0_17], %23 {strides = array<i32>} : memref<1x128xf32, #tpu.memory_space<vmem>>, vector<1x128xf32>,
    %c0_18 = arith.constant 0 : index
    %c0_19 = arith.constant 0 : index
    %25 = vector.load %arg10[%c0_18, %c0_19] : memref<1x128xf32, #tpu.memory_space<vmem>>, vector<1x128xf32>
    %cst_20 = arith.constant dense<0.000000e+00> : vector<128xf32>
    %26 = vector.multi_reduction <add>, %14, %cst_20 [0] : vector<256x128xf32> to vector<128xf32>
    %27 = vector.shape_cast %26 : vector<128xf32> to vector<1x128xf32>
    %28 = arith.addf %25, %27 : vector<1x128xf32>
    %c0_21 = arith.constant 0 : index
    %c0_22 = arith.constant 0 : index
    %29 = vector.load %arg10[%c0_21, %c0_22] : memref<1x128xf32, #tpu.memory_space<vmem>>, vector<1x128xf32>
    tpu.vector_store %arg10[%c0_21, %c0_22], %28 {strides = array<i32>} : memref<1x128xf32, #tpu.memory_space<vmem>>, vector<1x128xf32>,
    %cst_23 = arith.constant dense<0.000000e+00> : vector<256xf32>
    %30 = vector.multi_reduction <add>, %18, %cst_23 [1] : vector<256x128xf32> to vector<256xf32>
    %31 = vector.shape_cast %30 : vector<256xf32> to vector<256x1xf32>
    %32 = vector.shape_cast %31 : vector<256x1xf32> to vector<1x1x256x1xf32>
    %c0_24 = arith.constant 0 : index
    %c0_25 = arith.constant 0 : index
    %c0_26 = arith.constant 0 : index
    %c0_27 = arith.constant 0 : index
    %33 = vector.load %arg8[%c0_24, %c0_25, %c0_26, %c0_27] : memref<1x1x256x1xf32, #tpu.memory_space<vmem>>, vector<1x1x256x1xf32>
    tpu.vector_store %arg8[%c0_24, %c0_25, %c0_26, %c0_27], %32 {strides = array<i32>} : memref<1x1x256x1xf32, #tpu.memory_space<vmem>>, vector<1x1x256x1xf32>,
    %c128_i32 = arith.constant 128 : i32
    %34 = arith.muli %arg0, %c128_i32 : i32
    %c256_i32 = arith.constant 256 : i32
    %35 = arith.muli %arg1, %c256_i32 : i32
    %c128_i32_28 = arith.constant 128 : i32
    %36 = arith.addi %34, %c128_i32_28 : i32
    %37 = arith.cmpi slt, %35, %36 : i32
    %c256_i32_29 = arith.constant 256 : i32
    %38 = arith.addi %35, %c256_i32_29 : i32
    %39 = arith.cmpi sgt, %38, %34 : i32
    %40 = arith.andi %37, %39 : i1
    %41 = arith.extui %40 : i1 to i32
    %c0_i32_30 = arith.constant 0 : i32
    %42 = arith.cmpi ne, %41, %c0_i32_30 : i32
    scf.if %42 {
      %46 = tpu.iota {dimensions = array<i32: 0>} : vector<256x128xi32>
      %47 = vector.broadcast %35 : i32 to vector<256x128xi32>
      %48 = arith.addi %47, %46 : vector<256x128xi32>
      %49 = tpu.iota {dimensions = array<i32: 1>} : vector<256x128xi32>
      %50 = vector.broadcast %34 : i32 to vector<256x128xi32>
      %51 = arith.addi %50, %49 : vector<256x128xi32>
      %52 = arith.cmpi eq, %48, %51 : vector<256x128xi32>
      %53 = arith.extui %52 : vector<256x128xi1> to vector<256x128xi32>
      %54 = arith.sitofp %53 : vector<256x128xi32> to vector<256x128xf32>
      %c0_33 = arith.constant 0 : index
      %c0_34 = arith.constant 0 : index
      %55 = vector.load %arg9[%c0_33, %c0_34] : memref<1x128xf32, #tpu.memory_space<vmem>>, vector<1x128xf32>
      %56 = arith.mulf %10, %54 : vector<256x128xf32>
      %cst_35 = arith.constant dense<0.000000e+00> : vector<128xf32>
      %57 = vector.multi_reduction <add>, %56, %cst_35 [0] : vector<256x128xf32> to vector<128xf32>
      %58 = vector.shape_cast %57 : vector<128xf32> to vector<1x128xf32>
      %59 = arith.subf %55, %58 : vector<1x128xf32>
      %c0_36 = arith.constant 0 : index
      %c0_37 = arith.constant 0 : index
      %60 = vector.load %arg9[%c0_36, %c0_37] : memref<1x128xf32, #tpu.memory_space<vmem>>, vector<1x128xf32>
      tpu.vector_store %arg9[%c0_36, %c0_37], %59 {strides = array<i32>} : memref<1x128xf32, #tpu.memory_space<vmem>>, vector<1x128xf32>,
      %c0_38 = arith.constant 0 : index
      %c0_39 = arith.constant 0 : index
      %61 = vector.load %arg10[%c0_38, %c0_39] : memref<1x128xf32, #tpu.memory_space<vmem>>, vector<1x128xf32>
      %62 = arith.mulf %14, %54 : vector<256x128xf32>
      %cst_40 = arith.constant dense<0.000000e+00> : vector<128xf32>
      %63 = vector.multi_reduction <add>, %62, %cst_40 [0] : vector<256x128xf32> to vector<128xf32>
      %64 = vector.shape_cast %63 : vector<128xf32> to vector<1x128xf32>
      %65 = arith.subf %61, %64 : vector<1x128xf32>
      %c0_41 = arith.constant 0 : index
      %c0_42 = arith.constant 0 : index
      %66 = vector.load %arg10[%c0_41, %c0_42] : memref<1x128xf32, #tpu.memory_space<vmem>>, vector<1x128xf32>
      tpu.vector_store %arg10[%c0_41, %c0_42], %65 {strides = array<i32>} : memref<1x128xf32, #tpu.memory_space<vmem>>, vector<1x128xf32>,
    } else {
    }
    %c0_i32_31 = arith.constant 0 : i32
    %43 = arith.cmpi eq, %arg1, %c0_i32_31 : i32
    %44 = arith.extui %43 : i1 to i32
    %c0_i32_32 = arith.constant 0 : i32
    %45 = arith.cmpi ne, %44, %c0_i32_32 : i32
    scf.if %45 {
      %c0_33 = arith.constant 0 : index
      %c0_34 = arith.constant 0 : index
      %46 = vector.load %arg9[%c0_33, %c0_34] : memref<1x128xf32, #tpu.memory_space<vmem>>, vector<1x128xf32>
      %47 = vector.shape_cast %46 : vector<1x128xf32> to vector<1x1x128xf32>
      %c0_35 = arith.constant 0 : index
      %c0_36 = arith.constant 0 : index
      %c0_37 = arith.constant 0 : index
      %48 = vector.load %arg6[%c0_35, %c0_36, %c0_37] : memref<1x1x128xf32, #tpu.memory_space<vmem>>, vector<1x1x128xf32>
      tpu.vector_store %arg6[%c0_35, %c0_36, %c0_37], %47 {strides = array<i32>} : memref<1x1x128xf32, #tpu.memory_space<vmem>>, vector<1x1x128xf32>,
      %c0_38 = arith.constant 0 : index
      %c0_39 = arith.constant 0 : index
      %49 = vector.load %arg10[%c0_38, %c0_39] : memref<1x128xf32, #tpu.memory_space<vmem>>, vector<1x128xf32>
      %50 = vector.shape_cast %49 : vector<1x128xf32> to vector<1x1x128xf32>
      %c0_40 = arith.constant 0 : index
      %c0_41 = arith.constant 0 : index
      %c0_42 = arith.constant 0 : index
      %51 = vector.load %arg7[%c0_40, %c0_41, %c0_42] : memref<1x1x128xf32, #tpu.memory_space<vmem>>, vector<1x1x128xf32>
      tpu.vector_store %arg7[%c0_40, %c0_41, %c0_42], %50 {strides = array<i32>} : memref<1x1x128xf32, #tpu.memory_space<vmem>>, vector<1x1x128xf32>,
    } else {
    }
    return
  }
  func.func @transform_0(%arg0: i32, %arg1: i32) -> (i32, i32) {
    %c0_i32 = arith.constant 0 : i32
    %c0_i32_0 = arith.constant 0 : i32
    return %arg0, %c0_i32 : i32, i32
  }
  func.func @transform_1(%arg0: i32, %arg1: i32) -> (i32, i32) {
    %c0_i32 = arith.constant 0 : i32
    %c0_i32_0 = arith.constant 0 : i32
    return %arg0, %c0_i32 : i32, i32
  }
  func.func @transform_2(%arg0: i32, %arg1: i32) -> (i32, i32) {
    %c0_i32 = arith.constant 0 : i32
    %c0_i32_0 = arith.constant 0 : i32
    return %arg1, %c0_i32 : i32, i32
  }
  func.func @transform_3(%arg0: i32, %arg1: i32) -> (i32, i32) {
    %c0_i32 = arith.constant 0 : i32
    %c0_i32_0 = arith.constant 0 : i32
    return %arg1, %c0_i32 : i32, i32
  }
  func.func @transform_4(%arg0: i32, %arg1: i32) -> (i32, i32, i32) {
    %c0_i32 = arith.constant 0 : i32
    %c0_i32_0 = arith.constant 0 : i32
    %c0_i32_1 = arith.constant 0 : i32
    return %arg0, %c0_i32, %c0_i32_0 : i32, i32, i32
  }
  func.func @transform_5(%arg0: i32, %arg1: i32) -> (i32, i32, i32) {
    %c0_i32 = arith.constant 0 : i32
    %c0_i32_0 = arith.constant 0 : i32
    %c0_i32_1 = arith.constant 0 : i32
    return %arg0, %c0_i32, %c0_i32_0 : i32, i32, i32
  }
  func.func @transform_6(%arg0: i32, %arg1: i32) -> (i32, i32, i32, i32) {
    %c0_i32 = arith.constant 0 : i32
    %c0_i32_0 = arith.constant 0 : i32
    %c0_i32_1 = arith.constant 0 : i32
    return %arg0, %arg1, %c0_i32, %c0_i32_0 : i32, i32, i32, i32
  }
}

</mosaic_0001>

<llo_original>
// kernel: tpu_custom_call.1
$region0: #{tpu_custom_call.1}
  #allocation0 [shape = 'u32[]', space=smem, size = 0x4, offset = 0x4, fixed_abs, tag = 'smem constant byte address 0x4 - core index']
  #allocation1 [shape = 'u32[144,128]{1,0:T(1,128)}', space=vmem, size = 0x12000, scoped, tag = 'internal scratch']
  #allocation2 [shape = 'f32[1,128]{1,0:T(1,128)}', space=vmem, size = 0x200, scoped, tag = 'scratch operand']
  #allocation3 [shape = 'f32[1,128]{1,0:T(1,128)}', space=vmem, size = 0x200, scoped, tag = 'scratch operand']
  %s0 = inlined_call_operand.vmem [shape: f32[256,64], index: 0, kind: input, shape index: {}]
  %s1 = inlined_call_operand.vmem [shape: f32[256,64], index: 1, kind: input, shape index: {}]
  %s2 = inlined_call_operand.vmem [shape: f32[256,64], index: 2, kind: input, shape index: {}]
  %s3 = inlined_call_operand.vmem [shape: f32[256,64], index: 3, kind: input, shape index: {}]
  %s4 = inlined_call_operand.hbm [shape: f32[2,1,128], index: 4, kind: output, shape index: {0}]
  %s5 = inlined_call_operand.hbm [shape: f32[2,1,128], index: 5, kind: output, shape index: {1}]
  %s6 = inlined_call_operand.vmem [shape: f32[2,1,256,1], index: 6, kind: output, shape index: {2}]
  %7 = xla_tuple %s4, %s5, %s6
  %s8 = sld [smem:[#allocation0]]
  $region77: #{tpu_custom_call.1} parent=0
    _
  %s10 = ssub.s32 1, %s8
  %s11 = scalar_select 0, %s10, %s8
  $region1: #{tpu_custom_call.1} parent=0
    #allocation4 [shape = 'u8[1024]{0}', space=vmem, size = 0x400, scoped, tag = 'output window, operand 0']
    #allocation5 [shape = 's32[2]{0}', space=sflag, size = 0x8, scoped, tag = 'scoped memory for tpu_custom_call.1']
    #allocation6 [shape = 'u8[1024]{0}', space=vmem, size = 0x400, scoped, tag = 'output window, operand 1']
    #allocation7 [shape = 's32[2]{0}', space=sflag, size = 0x8, scoped, tag = 'scoped memory for tpu_custom_call.1']
    %12 = vsyncpa [#allocation5], 0
    %s13 = scalar_lea.sflag [#allocation5], 1
    %14 = vsyncpa %s13, 0
    %15 = vsyncpa [#allocation7], 0
    %s16 = scalar_lea.sflag [#allocation7], 1
    %17 = vsyncpa %s16, 0
    loop: start=0, step=1, limit=4
    $region2: #{tpu_custom_call.1} parent=1 // loop_pre_header
      _
    $region3: #{tpu_custom_call.1} parent=1 // loop_header
      %s19 = sphi 0, %s23
      %p20 = scmp.ge.s32.totalorder %s19, 4
      %s26 = sphi 0, %s38
      %s27 = sphi 0, %s34
      %s28 = sphi 0, %s26
      %s29 = sphi 0, %s27
      %s30 = sphi 0, %s28
      %s31 = sphi 0, %s29
      %s41 = sphi 0, %s43
      %s44 = sphi 0, %s41
      %s45 = sphi 0, %s44
      %s61 = sphi 0, %s45
      %s67 = sphi 0, %s69
      %s70 = sphi 0, %s67
      %s71 = sphi 0, %s70
      %s87 = sphi 0, %s71
      %s93 = sphi 0, %s95
      %s96 = sphi 0, %s93
      %s97 = sphi 0, %s96
      %s113 = sphi 0, %s97
      %s119 = sphi 0, %s121
      %s122 = sphi 0, %s119
      %s123 = sphi 0, %s122
      %s139 = sphi 0, %s123
      %s145 = sphi 0, %s147
      %s148 = sphi 0, %s145
      %s149 = sphi 0, %s148
      %s165 = sphi 0, %s149
      %s171 = sphi 0, %s173
      %s174 = sphi 0, %s171
      %s175 = sphi 0, %s174
      %s191 = sphi 0, %s175
      %s199 = sphi 0, %s201
      %s202 = sphi 0, %s199
      %s203 = sphi 0, %s202
      %s219 = sphi 0, %s203
    $region4: #{tpu_custom_call.1} parent=1 // loop_header_branch
      %22 = sbr.rel (%p20) target = $region8
    $region5: #{tpu_custom_call.1} parent=1 // loop_body
      %s24 = ssub.s32 %s19, 1
      %s25 = ssub.s32 %s19, 2
      %s32 = sadd.s32 1, %s27
      %p33 = scmp.ge.s32.totalorder %s32, 1
      %s34 = scalar_select %p33, 0, %s32
      %s35 = sadd.s32 1, %s26
      %s36 = scalar_select %p33, %s35, %s26
      %p37 = scmp.ge.s32.totalorder %s36, 2
      %s38 = scalar_select %p37, 0, %s36
      %s39 = ssub.s32 %s26, %s38
      %p40 = scmp.eq.s32.totalorder %s39, 0
      %s42 = sadd.s32 %s41, 1
      %s43 = scalar_select %p40, %s41, %s42
      %p46 = pneg %p40
      %p47 = scmp.eq.s32.totalorder %s19, 1
      %p48 = por %p46, %p47
      %p49 = scmp.ne.s32.totalorder %s41, %s44
      %p50 = scmp.eq.s32.totalorder %s19, 0
      %p51 = por %p49, %p50
      %p52 = scmp.ne.s32.totalorder %s41, %s44
      %p53 = scmp.eq.s32.totalorder %s24, 1
      %p54 = por %p52, %p53
      %p55 = scmp.ne.s32.totalorder %s44, %s45
      %p56 = scmp.eq.s32.totalorder %s24, 0
      %p57 = por %p55, %p56
      %p58 = scmp.ne.s32.totalorder %s44, %s45
      %p59 = scmp.eq.s32.totalorder %s25, 1
      %p60 = por %p58, %p59
      %p62 = scmp.ne.s32.totalorder %s45, %s61
      %p63 = scmp.eq.s32.totalorder %s25, 0
      %p64 = por %p62, %p63
      %s65 = ssub.s32 %s26, %s38
      %p66 = scmp.eq.s32.totalorder %s65, 0
      %s68 = sadd.s32 %s67, 1
      %s69 = scalar_select %p66, %s67, %s68
      %p72 = pneg %p66
      %p73 = scmp.eq.s32.totalorder %s19, 1
      %p74 = por %p72, %p73
      %p75 = scmp.ne.s32.totalorder %s67, %s70
      %p76 = scmp.eq.s32.totalorder %s19, 0
      %p77 = por %p75, %p76
      %p78 = scmp.ne.s32.totalorder %s67, %s70
      %p79 = scmp.eq.s32.totalorder %s24, 1
      %p80 = por %p78, %p79
      %p81 = scmp.ne.s32.totalorder %s70, %s71
      %p82 = scmp.eq.s32.totalorder %s24, 0
      %p83 = por %p81, %p82
      %p84 = scmp.ne.s32.totalorder %s70, %s71
      %p85 = scmp.eq.s32.totalorder %s25, 1
      %p86 = por %p84, %p85
      %p88 = scmp.ne.s32.totalorder %s71, %s87
      %p89 = scmp.eq.s32.totalorder %s25, 0
      %p90 = por %p88, %p89
      %s91 = ssub.s32 %s27, %s34
      %p92 = scmp.eq.s32.totalorder %s91, 0
      %s94 = sadd.s32 %s93, 1
      %s95 = scalar_select %p92, %s93, %s94
      %p98 = pneg %p92
      %p99 = scmp.eq.s32.totalorder %s19, 1
      %p100 = por %p98, %p99
      %p101 = scmp.ne.s32.totalorder %s93, %s96
      %p102 = scmp.eq.s32.totalorder %s19, 0
      %p103 = por %p101, %p102
      %p104 = scmp.ne.s32.totalorder %s93, %s96
      %p105 = scmp.eq.s32.totalorder %s24, 1
      %p106 = por %p104, %p105
      %p107 = scmp.ne.s32.totalorder %s96, %s97
      %p108 = scmp.eq.s32.totalorder %s24, 0
      %p109 = por %p107, %p108
      %p110 = scmp.ne.s32.totalorder %s96, %s97
      %p111 = scmp.eq.s32.totalorder %s25, 1
      %p112 = por %p110, %p111
      %p114 = scmp.ne.s32.totalorder %s97, %s113
      %p115 = scmp.eq.s32.totalorder %s25, 0
      %p116 = por %p114, %p115
      %s117 = ssub.s32 %s27, %s34
      %p118 = scmp.eq.s32.totalorder %s117, 0
      %s120 = sadd.s32 %s119, 1
      %s121 = scalar_select %p118, %s119, %s120
      %p124 = pneg %p118
      %p125 = scmp.eq.s32.totalorder %s19, 1
      %p126 = por %p124, %p125
      %p127 = scmp.ne.s32.totalorder %s119, %s122
      %p128 = scmp.eq.s32.totalorder %s19, 0
      %p129 = por %p127, %p128
      %p130 = scmp.ne.s32.totalorder %s119, %s122
      %p131 = scmp.eq.s32.totalorder %s24, 1
      %p132 = por %p130, %p131
      %p133 = scmp.ne.s32.totalorder %s122, %s123
      %p134 = scmp.eq.s32.totalorder %s24, 0
      %p135 = por %p133, %p134
      %p136 = scmp.ne.s32.totalorder %s122, %s123
      %p137 = scmp.eq.s32.totalorder %s25, 1
      %p138 = por %p136, %p137
      %p140 = scmp.ne.s32.totalorder %s123, %s139
      %p141 = scmp.eq.s32.totalorder %s25, 0
      %p142 = por %p140, %p141
      %s143 = ssub.s32 %s26, %s38
      %p144 = scmp.eq.s32.totalorder %s143, 0
      %s146 = sadd.s32 %s145, 1
      %s147 = scalar_select %p144, %s145, %s146
      %p150 = pneg %p144
      %p151 = scmp.eq.s32.totalorder %s19, 1
      %p152 = por %p150, %p151
      %p153 = scmp.ne.s32.totalorder %s145, %s148
      %p154 = scmp.eq.s32.totalorder %s19, 0
      %p155 = por %p153, %p154
      %p156 = scmp.ne.s32.totalorder %s145, %s148
      %p157 = scmp.eq.s32.totalorder %s24, 1
      %p158 = por %p156, %p157
      %p159 = scmp.ne.s32.totalorder %s148, %s149
      %p160 = scmp.eq.s32.totalorder %s24, 0
      %p161 = por %p159, %p160
      %p162 = scmp.ne.s32.totalorder %s148, %s149
      %p163 = scmp.eq.s32.totalorder %s25, 1
      %p164 = por %p162, %p163
      %p166 = scmp.ne.s32.totalorder %s149, %s165
      %p167 = scmp.eq.s32.totalorder %s25, 0
      %p168 = por %p166, %p167
      %s169 = ssub.s32 %s26, %s38
      %p170 = scmp.eq.s32.totalorder %s169, 0
      %s172 = sadd.s32 %s171, 1
      %s173 = scalar_select %p170, %s171, %s172
      %p176 = pneg %p170
      %p177 = scmp.eq.s32.totalorder %s19, 1
      %p178 = por %p176, %p177
      %p179 = scmp.ne.s32.totalorder %s171, %s174
      %p180 = scmp.eq.s32.totalorder %s19, 0
      %p181 = por %p179, %p180
      %p182 = scmp.ne.s32.totalorder %s171, %s174
      %p183 = scmp.eq.s32.totalorder %s24, 1
      %p184 = por %p182, %p183
      %p185 = scmp.ne.s32.totalorder %s174, %s175
      %p186 = scmp.eq.s32.totalorder %s24, 0
      %p187 = por %p185, %p186
      %p188 = scmp.ne.s32.totalorder %s174, %s175
      %p189 = scmp.eq.s32.totalorder %s25, 1
      %p190 = por %p188, %p189
      %p192 = scmp.ne.s32.totalorder %s175, %s191
      %p193 = scmp.eq.s32.totalorder %s25, 0
      %p194 = por %p192, %p193
      %s195 = ssub.s32 %s26, %s38
      %s196 = ssub.s32 %s27, %s34
      %s197 = sor.u32 %s195, %s196
      %p198 = scmp.eq.s32.totalorder %s197, 0
      %s200 = sadd.s32 %s199, 1
      %s201 = scalar_select %p198, %s199, %s200
      %p204 = pneg %p198
      %p205 = scmp.eq.s32.totalorder %s19, 1
      %p206 = por %p204, %p205
      %p207 = scmp.ne.s32.totalorder %s199, %s202
      %p208 = scmp.eq.s32.totalorder %s19, 0
      %p209 = por %p207, %p208
      %p210 = scmp.ne.s32.totalorder %s199, %s202
      %p211 = scmp.eq.s32.totalorder %s24, 1
      %p212 = por %p210, %p211
      %p213 = scmp.ne.s32.totalorder %s202, %s203
      %p214 = scmp.eq.s32.totalorder %s24, 0
      %p215 = por %p213, %p214
      %p216 = scmp.ne.s32.totalorder %s202, %s203
      %p217 = scmp.eq.s32.totalorder %s25, 1
      %p218 = por %p216, %p217
      %p220 = scmp.ne.s32.totalorder %s203, %s219
      %p221 = scmp.eq.s32.totalorder %s25, 0
      %p222 = por %p220, %p221
      %p223 = scmp.le.s32.totalorder 1, %s19
      %p224 = scmp.lt.s32.totalorder %s19, 3
      %p225 = pnand %p223, %p224
      %p226 = pneg %p225
      // Predicated region
      $region9: #{tpu_custom_call.1} parent=5 // pred_check
        _
      $region10: #{tpu_custom_call.1} parent=5 // pred_check_branch
        %228 = sbr.rel (%p225) target = $region12
      $region11: #{tpu_custom_call.1} parent=5 // pred_region
        %s229 = ssub.s32 %s19, 1
        // Predicated region
        $region13: #{tpu_custom_call.1} parent=11 // pred_check
          %p230 = pneg %p109
        $region14: #{tpu_custom_call.1} parent=11 // pred_check_branch
          %232 = sbr.rel (%p230) target = $region16
        $region15: #{tpu_custom_call.1} parent=11 // pred_region
          %s233 = smul.u32 32, %s29
          %p234 = scmp.lt.s32.totalorder %s233, 31
          %s235 = scalar_select %p234, %s233, 31
          %s236 = smul.addr %s235, 8
          %s237 = scalar_lea.vmem %s2, %s236
          %s238 = smul.u32 32, %s29
        $region16: #{tpu_custom_call.1} parent=11 // pred_fallthru
          _
        // Predicated region
        $region17: #{tpu_custom_call.1} parent=11 // pred_check
          %p239 = pneg %p135
        $region18: #{tpu_custom_call.1} parent=11 // pred_check_branch
          %241 = sbr.rel (%p239) target = $region20
        $region19: #{tpu_custom_call.1} parent=11 // pred_region
          %s242 = smul.u32 32, %s29
          %p243 = scmp.lt.s32.totalorder %s242, 31
          %s244 = scalar_select %p243, %s242, 31
          %s245 = smul.addr %s244, 8
          %s246 = scalar_lea.vmem %s3, %s245
          %s247 = smul.u32 32, %s29
        $region20: #{tpu_custom_call.1} parent=11 // pred_fallthru
          _
      $region12: #{tpu_custom_call.1} parent=5 // pred_fallthru
        _
      %p248 = scmp.lt.s32.totalorder %s19, 2
      // Predicated region
      $region21: #{tpu_custom_call.1} parent=5 // pred_check
        %p249 = pneg %p248
      $region22: #{tpu_custom_call.1} parent=5 // pred_check_branch
        %251 = sbr.rel (%p249) target = $region24
      $region23: #{tpu_custom_call.1} parent=5 // pred_region
        // Predicated region
        $region25: #{tpu_custom_call.1} parent=23 // pred_check
          %p252 = pneg %p51
        $region26: #{tpu_custom_call.1} parent=23 // pred_check_branch
          %254 = sbr.rel (%p252) target = $region28
        $region27: #{tpu_custom_call.1} parent=23 // pred_region
          %s255 = smul.u32 16, %s26
          %p256 = scmp.lt.s32.totalorder %s255, 31
          %s257 = scalar_select %p256, %s255, 31
          %s258 = smul.addr %s257, 8
          %s259 = scalar_lea.vmem %s0, %s258
          %s260 = smul.u32 16, %s26
        $region28: #{tpu_custom_call.1} parent=23 // pred_fallthru
          _
        // Predicated region
        $region29: #{tpu_custom_call.1} parent=23 // pred_check
          %p261 = pneg %p77
        $region30: #{tpu_custom_call.1} parent=23 // pred_check_branch
          %263 = sbr.rel (%p261) target = $region32
        $region31: #{tpu_custom_call.1} parent=23 // pred_region
          %s264 = smul.u32 16, %s26
          %p265 = scmp.lt.s32.totalorder %s264, 31
          %s266 = scalar_select %p265, %s264, 31
          %s267 = smul.addr %s266, 8
          %s268 = scalar_lea.vmem %s1, %s267
          %s269 = smul.u32 16, %s26
        $region32: #{tpu_custom_call.1} parent=23 // pred_fallthru
          _
      $region24: #{tpu_custom_call.1} parent=5 // pred_fallthru
        _
      %p270 = scmp.le.s32.totalorder 1, %s19
      %p271 = scmp.lt.s32.totalorder %s19, 3
      %p272 = pnand %p270, %p271
      %p273 = pneg %p272
      // Predicated region
      $region33: #{tpu_custom_call.1} parent=5 // pred_check
        _
      $region34: #{tpu_custom_call.1} parent=5 // pred_check_branch
        %275 = sbr.rel (%p272) target = $region36
      $region35: #{tpu_custom_call.1} parent=5 // pred_region
        %s276 = ssub.s32 %s19, 1
        %s277 = smul.u32 16, %s28
        %p278 = scmp.lt.s32.totalorder %s277, 31
        %s279 = scalar_select %p278, %s277, 31
        %s280 = smul.addr %s279, 8
        %s281 = scalar_lea.vmem %s0, %s280
        %p282 = pneg %p57
        %p283 = pneg %p54
        %s284 = smul.u32 16, %s28
        %p285 = scmp.lt.s32.totalorder %s284, 31
        %s286 = scalar_select %p285, %s284, 31
        %s287 = smul.addr %s286, 8
        %s288 = scalar_lea.vmem %s1, %s287
        %p289 = pneg %p83
        %p290 = pneg %p80
        %s291 = smul.u32 32, %s29
        %p292 = scmp.lt.s32.totalorder %s291, 31
        %s293 = scalar_select %p292, %s291, 31
        %s294 = smul.addr %s293, 8
        %s295 = scalar_lea.vmem %s2, %s294
        %p296 = pneg %p109
        %p297 = pneg %p106
        %s298 = smul.u32 32, %s29
        %p299 = scmp.lt.s32.totalorder %s298, 31
        %s300 = scalar_select %p299, %s298, 31
        %s301 = smul.addr %s300, 8
        %s302 = scalar_lea.vmem %s3, %s301
        %p303 = pneg %p135
        %p304 = pneg %p132
        %p305 = pneg %p161
        %p306 = pneg %p158
        %s307 = sand.u32 %s148, 1
        %s308 = scalar_lea.sflag [#allocation5], %s307
        %s309 = sand.u32 %s148, 1
        %s310 = scalar_lea.vmem [#allocation4], %s309
        %p311 = pneg %p187
        %p312 = pneg %p184
        %s313 = sand.u32 %s174, 1
        %s314 = scalar_lea.sflag [#allocation7], %s313
        %s315 = sand.u32 %s174, 1
        %s316 = scalar_lea.vmem [#allocation6], %s315
        %p317 = pneg %p215
        %p318 = pneg %p212
        %p319 = scmp.lt.s32.totalorder %s28, 1
        %s320 = scalar_select %p319, %s28, 1
        %p321 = scmp.lt.s32.totalorder %s29, 0
        %s322 = scalar_select %p321, %s29, 0
        %s323 = smul.addr %s322, 32
        %s324 = smul.addr %s320, 32
        %s325 = sadd.s32 %s323, %s324
        %s326 = smul.addr %s325, 8
        %s327 = scalar_lea.vmem %s6, %s326
        %s328 = smul.u32 16, %s28
        %p329 = scmp.lt.s32.totalorder %s328, 31
        %s330 = scalar_select %p329, %s328, 31
        %s331 = smul.addr %s330, 8
        %s332 = scalar_lea.vmem %s0, %s331
        %s333 = smul.u32 16, %s28
        %s334 = smul.u32 16, %s28
        %p335 = scmp.lt.s32.totalorder %s334, 31
        %s336 = scalar_select %p335, %s334, 31
        %s337 = smul.addr %s336, 8
        %s338 = scalar_lea.vmem %s1, %s337
        %s339 = smul.u32 16, %s28
        %s340 = smul.u32 32, %s29
        %p341 = scmp.lt.s32.totalorder %s340, 31
        %s342 = scalar_select %p341, %s340, 31
        %s343 = smul.addr %s342, 8
        %s344 = scalar_lea.vmem %s2, %s343
        %s345 = smul.u32 32, %s29
        %s346 = smul.u32 32, %s29
        %p347 = scmp.lt.s32.totalorder %s346, 31
        %s348 = scalar_select %p347, %s346, 31
        %s349 = smul.addr %s348, 8
        %s350 = scalar_lea.vmem %s3, %s349
        %s351 = smul.u32 32, %s29
        %p352 = scmp.lt.s32.totalorder %s28, 1
        %s353 = scalar_select %p352, %s28, 1
        %p354 = scmp.lt.s32.totalorder %s29, 0
        %s355 = scalar_select %p354, %s29, 0
        %s356 = smul.addr %s355, 32
        %s357 = smul.addr %s353, 32
        %s358 = sadd.s32 %s356, %s357
        %s359 = smul.addr %s358, 8
        %s360 = scalar_lea.vmem %s6, %s359
        %p361 = scmp.eq.s32.totalorder %s29, 0
        // Predicated region
        $region37: #{tpu_custom_call.1} parent=35 // pred_check
          %p362 = pneg %p361
        $region38: #{tpu_custom_call.1} parent=35 // pred_check_branch
          %364 = sbr.rel (%p362) target = $region40
        $region39: #{tpu_custom_call.1} parent=35 // pred_region
          %365 = vst [vmem:[#allocation2] sm:$0x1] 0.0
          %366 = vst [vmem:[#allocation3] sm:$0x1] 0.0
        $region40: #{tpu_custom_call.1} parent=35 // pred_fallthru
          _
        %v367 = vld [vmem:[%s332] sm:$0xff]
        %v368 = vld [vmem:[%s332 + $0x8] sm:$0xff]
        %v369 = vld [vmem:[%s332 + $0x10] sm:$0xff]
        %v370 = vld [vmem:[%s332 + $0x18] sm:$0xff]
        %v371 = vld [vmem:[%s332 + $0x20] sm:$0xff]
        %v372 = vld [vmem:[%s332 + $0x28] sm:$0xff]
        %v373 = vld [vmem:[%s332 + $0x30] sm:$0xff]
        %v374 = vld [vmem:[%s332 + $0x38] sm:$0xff]
        %v375 = vld [vmem:[%s332 + $0x40] sm:$0xff]
        %v376 = vld [vmem:[%s332 + $0x48] sm:$0xff]
        %v377 = vld [vmem:[%s332 + $0x50] sm:$0xff]
        %v378 = vld [vmem:[%s332 + $0x58] sm:$0xff]
        %v379 = vld [vmem:[%s332 + $0x60] sm:$0xff]
        %v380 = vld [vmem:[%s332 + $0x68] sm:$0xff]
        %v381 = vld [vmem:[%s332 + $0x70] sm:$0xff]
        %v382 = vld [vmem:[%s332 + $0x78] sm:$0xff]
        %v383 = vld [vmem:[%s338] sm:$0xff]
        %v384 = vld [vmem:[%s338 + $0x8] sm:$0xff]
        %v385 = vld [vmem:[%s338 + $0x10] sm:$0xff]
        %v386 = vld [vmem:[%s338 + $0x18] sm:$0xff]
        %v387 = vld [vmem:[%s338 + $0x20] sm:$0xff]
        %v388 = vld [vmem:[%s338 + $0x28] sm:$0xff]
        %v389 = vld [vmem:[%s338 + $0x30] sm:$0xff]
        %v390 = vld [vmem:[%s338 + $0x38] sm:$0xff]
        %v391 = vld [vmem:[%s338 + $0x40] sm:$0xff]
        %v392 = vld [vmem:[%s338 + $0x48] sm:$0xff]
        %v393 = vld [vmem:[%s338 + $0x50] sm:$0xff]
        %v394 = vld [vmem:[%s338 + $0x58] sm:$0xff]
        %v395 = vld [vmem:[%s338 + $0x60] sm:$0xff]
        %v396 = vld [vmem:[%s338 + $0x68] sm:$0xff]
        %v397 = vld [vmem:[%s338 + $0x70] sm:$0xff]
        %v398 = vld [vmem:[%s338 + $0x78] sm:$0xff]
        %v399 = vld [vmem:[%s344] sm:$0xff]
        %v400 = vld [vmem:[%s344 + $0x8] sm:$0xff]
        %v401 = vld [vmem:[%s344 + $0x10] sm:$0xff]
        %v402 = vld [vmem:[%s344 + $0x18] sm:$0xff]
        %v403 = vld [vmem:[%s344 + $0x20] sm:$0xff]
        %v404 = vld [vmem:[%s344 + $0x28] sm:$0xff]
        %v405 = vld [vmem:[%s344 + $0x30] sm:$0xff]
        %v406 = vld [vmem:[%s344 + $0x38] sm:$0xff]
        %v407 = vld [vmem:[%s344 + $0x40] sm:$0xff]
        %v408 = vld [vmem:[%s344 + $0x48] sm:$0xff]
        %v409 = vld [vmem:[%s344 + $0x50] sm:$0xff]
        %v410 = vld [vmem:[%s344 + $0x58] sm:$0xff]
        %v411 = vld [vmem:[%s344 + $0x60] sm:$0xff]
        %v412 = vld [vmem:[%s344 + $0x68] sm:$0xff]
        %v413 = vld [vmem:[%s344 + $0x70] sm:$0xff]
        %v414 = vld [vmem:[%s344 + $0x78] sm:$0xff]
        %v415 = vld [vmem:[%s344 + $0x80] sm:$0xff]
        %v416 = vld [vmem:[%s344 + $0x88] sm:$0xff]
        %v417 = vld [vmem:[%s344 + $0x90] sm:$0xff]
        %v418 = vld [vmem:[%s344 + $0x98] sm:$0xff]
        %v419 = vld [vmem:[%s344 + $0xa0] sm:$0xff]
        %v420 = vld [vmem:[%s344 + $0xa8] sm:$0xff]
        %v421 = vld [vmem:[%s344 + $0xb0] sm:$0xff]
        %v422 = vld [vmem:[%s344 + $0xb8] sm:$0xff]
        %v423 = vld [vmem:[%s344 + $0xc0] sm:$0xff]
        %v424 = vld [vmem:[%s344 + $0xc8] sm:$0xff]
        %v425 = vld [vmem:[%s344 + $0xd0] sm:$0xff]
        %v426 = vld [vmem:[%s344 + $0xd8] sm:$0xff]
        %v427 = vld [vmem:[%s344 + $0xe0] sm:$0xff]
        %v428 = vld [vmem:[%s344 + $0xe8] sm:$0xff]
        %v429 = vld [vmem:[%s344 + $0xf0] sm:$0xff]
        %v430 = vld [vmem:[%s344 + $0xf8] sm:$0xff]
        %v431 = vld [vmem:[%s350] sm:$0xff]
        %v432 = vld [vmem:[%s350 + $0x8] sm:$0xff]
        %v433 = vld [vmem:[%s350 + $0x10] sm:$0xff]
        %v434 = vld [vmem:[%s350 + $0x18] sm:$0xff]
        %v435 = vld [vmem:[%s350 + $0x20] sm:$0xff]
        %v436 = vld [vmem:[%s350 + $0x28] sm:$0xff]
        %v437 = vld [vmem:[%s350 + $0x30] sm:$0xff]
        %v438 = vld [vmem:[%s350 + $0x38] sm:$0xff]
        %v439 = vld [vmem:[%s350 + $0x40] sm:$0xff]
        %v440 = vld [vmem:[%s350 + $0x48] sm:$0xff]
        %v441 = vld [vmem:[%s350 + $0x50] sm:$0xff]
        %v442 = vld [vmem:[%s350 + $0x58] sm:$0xff]
        %v443 = vld [vmem:[%s350 + $0x60] sm:$0xff]
        %v444 = vld [vmem:[%s350 + $0x68] sm:$0xff]
        %v445 = vld [vmem:[%s350 + $0x70] sm:$0xff]
        %v446 = vld [vmem:[%s350 + $0x78] sm:$0xff]
        %v447 = vld [vmem:[%s350 + $0x80] sm:$0xff]
        %v448 = vld [vmem:[%s350 + $0x88] sm:$0xff]
        %v449 = vld [vmem:[%s350 + $0x90] sm:$0xff]
        %v450 = vld [vmem:[%s350 + $0x98] sm:$0xff]
        %v451 = vld [vmem:[%s350 + $0xa0] sm:$0xff]
        %v452 = vld [vmem:[%s350 + $0xa8] sm:$0xff]
        %v453 = vld [vmem:[%s350 + $0xb0] sm:$0xff]
        %v454 = vld [vmem:[%s350 + $0xb8] sm:$0xff]
        %v455 = vld [vmem:[%s350 + $0xc0] sm:$0xff]
        %v456 = vld [vmem:[%s350 + $0xc8] sm:$0xff]
        %v457 = vld [vmem:[%s350 + $0xd0] sm:$0xff]
        %v458 = vld [vmem:[%s350 + $0xd8] sm:$0xff]
        %v459 = vld [vmem:[%s350 + $0xe0] sm:$0xff]
        %v460 = vld [vmem:[%s350 + $0xe8] sm:$0xff]
        %v461 = vld [vmem:[%s350 + $0xf0] sm:$0xff]
        %v462 = vld [vmem:[%s350 + $0xf8] sm:$0xff]
        %vm463 = vcmask 523264
        %v465 = vsel %vm463, %v399, 0
        %v468 = vsel %vm463, %v400, 0
        %v471 = vsel %vm463, %v401, 0
        %v474 = vsel %vm463, %v402, 0
        %v477 = vsel %vm463, %v403, 0
        %v480 = vsel %vm463, %v404, 0
        %v483 = vsel %vm463, %v405, 0
        %v486 = vsel %vm463, %v406, 0
        %v489 = vsel %vm463, %v407, 0
        %v492 = vsel %vm463, %v408, 0
        %v495 = vsel %vm463, %v409, 0
        %v498 = vsel %vm463, %v410, 0
        %v501 = vsel %vm463, %v411, 0
        %v504 = vsel %vm463, %v412, 0
        %v507 = vsel %vm463, %v413, 0
        %v510 = vsel %vm463, %v414, 0
        %v513 = vsel %vm463, %v415, 0
        %v516 = vsel %vm463, %v416, 0
        %v519 = vsel %vm463, %v417, 0
        %v522 = vsel %vm463, %v418, 0
        %v525 = vsel %vm463, %v419, 0
        %v528 = vsel %vm463, %v420, 0
        %v531 = vsel %vm463, %v421, 0
        %v534 = vsel %vm463, %v422, 0
        %v537 = vsel %vm463, %v423, 0
        %v540 = vsel %vm463, %v424, 0
        %v543 = vsel %vm463, %v425, 0
        %v546 = vsel %vm463, %v426, 0
        %v549 = vsel %vm463, %v427, 0
        %v552 = vsel %vm463, %v428, 0
        %v555 = vsel %vm463, %v429, 0
        %v558 = vsel %vm463, %v430, 0
        %v561 = vsel %vm463, %v367, 0
        %v564 = vsel %vm463, %v368, 0
        %v567 = vsel %vm463, %v369, 0
        %v570 = vsel %vm463, %v370, 0
        %v573 = vsel %vm463, %v371, 0
        %v576 = vsel %vm463, %v372, 0
        %v579 = vsel %vm463, %v373, 0
        %v582 = vsel %vm463, %v374, 0
        %v585 = vsel %vm463, %v375, 0
        %v588 = vsel %vm463, %v376, 0
        %v591 = vsel %vm463, %v377, 0
        %v594 = vsel %vm463, %v378, 0
        %v597 = vsel %vm463, %v379, 0
        %v600 = vsel %vm463, %v380, 0
        %v603 = vsel %vm463, %v381, 0
        %v606 = vsel %vm463, %v382, 0
        %608 = vmatprep.subr.mxu0 0.0
        %609 = vmatpush1.xpose.msra.mxu0 %v561
        %610 = vmatprep.subr.mxu0 0.0
        %611 = vmatpush1.xpose.msra.mxu0 %v564
        %612 = vmatprep.subr.mxu0 0.0
        %613 = vmatpush1.xpose.msra.mxu0 %v567
        %614 = vmatprep.subr.mxu0 0.0
        %615 = vmatpush1.xpose.msra.mxu0 %v570
        %616 = vmatprep.subr.mxu0 0.0
        %617 = vmatpush1.xpose.msra.mxu0 %v573
        %618 = vmatprep.subr.mxu0 0.0
        %619 = vmatpush1.xpose.msra.mxu0 %v576
        %620 = vmatprep.subr.mxu0 0.0
        %621 = vmatpush1.xpose.msra.mxu0 %v579
        %622 = vmatprep.subr.mxu0 0.0
        %623 = vmatpush1.xpose.msra.mxu0 %v582
        %624 = vmatprep.subr.mxu0 0.0
        %625 = vmatpush1.xpose.msra.mxu0 %v585
        %626 = vmatprep.subr.mxu0 0.0
        %627 = vmatpush1.xpose.msra.mxu0 %v588
        %628 = vmatprep.subr.mxu0 0.0
        %629 = vmatpush1.xpose.msra.mxu0 %v591
        %630 = vmatprep.subr.mxu0 0.0
        %631 = vmatpush1.xpose.msra.mxu0 %v594
        %632 = vmatprep.subr.mxu0 0.0
        %633 = vmatpush1.xpose.msra.mxu0 %v597
        %634 = vmatprep.subr.mxu0 0.0
        %635 = vmatpush1.xpose.msra.mxu0 %v600
        %636 = vmatprep.subr.mxu0 0.0
        %637 = vmatpush1.xpose.msra.mxu0 %v603
        %638 = vmatprep.subr.mxu0 0.0
        %639 = vmatpush1.xpose.msra.mxu0 %v606
        %640 = vmatprep.subr.mxu0 0.0
        %641 = vmatpush1.xpose.msra.mxu0 0.0
        %642 = vmatprep.subr.mxu0 0.0
        %643 = vmatpush1.xpose.msra.mxu0 0.0
        %644 = vmatprep.subr.mxu0 0.0
        %645 = vmatpush1.xpose.msra.mxu0 0.0
        %646 = vmatprep.subr.mxu0 0.0
        %647 = vmatpush1.xpose.msra.mxu0 0.0
        %648 = vmatprep.subr.mxu0 0.0
        %649 = vmatpush1.xpose.msra.mxu0 0.0
        %650 = vmatprep.subr.mxu0 0.0
        %651 = vmatpush1.xpose.msra.mxu0 0.0
        %652 = vmatprep.subr.mxu0 0.0
        %653 = vmatpush1.xpose.msra.mxu0 0.0
        %654 = vmatprep.subr.mxu0 0.0
        %655 = vmatpush1.xpose.msra.mxu0 0.0
        %656 = vmatprep.subr.mxu0 0.0
        %657 = vmatpush1.xpose.msra.mxu0 0.0
        %658 = vmatprep.subr.mxu0 0.0
        %659 = vmatpush1.xpose.msra.mxu0 0.0
        %660 = vmatprep.subr.mxu0 0.0
        %661 = vmatpush1.xpose.msra.mxu0 0.0
        %662 = vmatprep.subr.mxu0 0.0
        %663 = vmatpush1.xpose.msra.mxu0 0.0
        %664 = vmatprep.subr.mxu0 0.0
        %665 = vmatpush1.xpose.msra.mxu0 0.0
        %666 = vmatprep.subr.mxu0 0.0
        %667 = vmatpush1.xpose.msra.mxu0 0.0
        %668 = vmatprep.subr.mxu0 0.0
        %669 = vmatpush1.xpose.msra.mxu0 0.0
        %670 = vmatprep.subr.mxu0 0.0
        %671 = vmatpush1.xpose.msra.mxu0 0.0
        %672 = vmatprep.mubr.f32.mxu0 0.0
        %673 = vmatmul.mubr.f32.gmra.mrb[0].mxu0 %v465
        %v674 = vpop.f32.mrb[0].mxu0
        %v675 = vadd.f32 0.0, %v674
        %v676 = vpop.f32.mrb[0].mxu0
        %677 = vmatprep.mubr.f32.mxu0 0.0
        %678 = vmatmul.mubr.f32.gmra.mrb[0].mxu0 %v468
        %v679 = vpop.f32.mrb[0].mxu0
        %v680 = vadd.f32 0.0, %v679
        %v681 = vpop.f32.mrb[0].mxu0
        %682 = vmatprep.mubr.f32.mxu0 0.0
        %683 = vmatmul.mubr.f32.gmra.mrb[0].mxu0 %v471
        %v684 = vpop.f32.mrb[0].mxu0
        %v685 = vadd.f32 0.0, %v684
        %v686 = vpop.f32.mrb[0].mxu0
        %687 = vmatprep.mubr.f32.mxu0 0.0
        %688 = vmatmul.mubr.f32.gmra.mrb[0].mxu0 %v474
        %v689 = vpop.f32.mrb[0].mxu0
        %v690 = vadd.f32 0.0, %v689
        %v691 = vpop.f32.mrb[0].mxu0
        %692 = vmatprep.mubr.f32.mxu0 0.0
        %693 = vmatmul.mubr.f32.gmra.mrb[0].mxu0 %v477
        %v694 = vpop.f32.mrb[0].mxu0
        %v695 = vadd.f32 0.0, %v694
        %v696 = vpop.f32.mrb[0].mxu0
        %697 = vmatprep.mubr.f32.mxu0 0.0
        %698 = vmatmul.mubr.f32.gmra.mrb[0].mxu0 %v480
        %v699 = vpop.f32.mrb[0].mxu0
        %v700 = vadd.f32 0.0, %v699
        %v701 = vpop.f32.mrb[0].mxu0
        %702 = vmatprep.mubr.f32.mxu0 0.0
        %703 = vmatmul.mubr.f32.gmra.mrb[0].mxu0 %v483
        %v704 = vpop.f32.mrb[0].mxu0
        %v705 = vadd.f32 0.0, %v704
        %v706 = vpop.f32.mrb[0].mxu0
        %707 = vmatprep.mubr.f32.mxu0 0.0
        %708 = vmatmul.mubr.f32.gmra.mrb[0].mxu0 %v486
        %v709 = vpop.f32.mrb[0].mxu0
        %v710 = vadd.f32 0.0, %v709
        %v711 = vpop.f32.mrb[0].mxu0
        %712 = vmatprep.mubr.f32.mxu0 0.0
        %713 = vmatmul.mubr.f32.gmra.mrb[0].mxu0 %v489
        %v714 = vpop.f32.mrb[0].mxu0
        %v715 = vadd.f32 0.0, %v714
        %v716 = vpop.f32.mrb[0].mxu0
        %717 = vmatprep.mubr.f32.mxu0 0.0
        %718 = vmatmul.mubr.f32.gmra.mrb[0].mxu0 %v492
        %v719 = vpop.f32.mrb[0].mxu0
        %v720 = vadd.f32 0.0, %v719
        %v721 = vpop.f32.mrb[0].mxu0
        %722 = vmatprep.mubr.f32.mxu0 0.0
        %723 = vmatmul.mubr.f32.gmra.mrb[0].mxu0 %v495
        %v724 = vpop.f32.mrb[0].mxu0
        %v725 = vadd.f32 0.0, %v724
        %v726 = vpop.f32.mrb[0].mxu0
        %727 = vmatprep.mubr.f32.mxu0 0.0
        %728 = vmatmul.mubr.f32.gmra.mrb[0].mxu0 %v498
        %v729 = vpop.f32.mrb[0].mxu0
        %v730 = vadd.f32 0.0, %v729
        %v731 = vpop.f32.mrb[0].mxu0
        %732 = vmatprep.mubr.f32.mxu0 0.0
        %733 = vmatmul.mubr.f32.gmra.mrb[0].mxu0 %v501
        %v734 = vpop.f32.mrb[0].mxu0
        %v735 = vadd.f32 0.0, %v734
        %v736 = vpop.f32.mrb[0].mxu0
        %737 = vmatprep.mubr.f32.mxu0 0.0
        %738 = vmatmul.mubr.f32.gmra.mrb[0].mxu0 %v504
        %v739 = vpop.f32.mrb[0].mxu0
        %v740 = vadd.f32 0.0, %v739
        %v741 = vpop.f32.mrb[0].mxu0
        %742 = vmatprep.mubr.f32.mxu0 0.0
        %743 = vmatmul.mubr.f32.gmra.mrb[0].mxu0 %v507
        %v744 = vpop.f32.mrb[0].mxu0
        %v745 = vadd.f32 0.0, %v744
        %v746 = vpop.f32.mrb[0].mxu0
        %747 = vmatprep.mubr.f32.mxu0 0.0
        %748 = vmatmul.mubr.f32.gmra.mrb[0].mxu0 %v510
        %v749 = vpop.f32.mrb[0].mxu0
        %v750 = vadd.f32 0.0, %v749
        %v751 = vpop.f32.mrb[0].mxu0
        %752 = vmatprep.mubr.f32.mxu0 0.0
        %753 = vmatmul.mubr.f32.gmra.mrb[0].mxu0 %v513
        %v754 = vpop.f32.mrb[0].mxu0
        %v755 = vadd.f32 0.0, %v754
        %v756 = vpop.f32.mrb[0].mxu0
        %757 = vmatprep.mubr.f32.mxu0 0.0
        %758 = vmatmul.mubr.f32.gmra.mrb[0].mxu0 %v516
        %v759 = vpop.f32.mrb[0].mxu0
        %v760 = vadd.f32 0.0, %v759
        %v761 = vpop.f32.mrb[0].mxu0
        %762 = vmatprep.mubr.f32.mxu0 0.0
        %763 = vmatmul.mubr.f32.gmra.mrb[0].mxu0 %v519
        %v764 = vpop.f32.mrb[0].mxu0
        %v765 = vadd.f32 0.0, %v764
        %v766 = vpop.f32.mrb[0].mxu0
        %767 = vmatprep.mubr.f32.mxu0 0.0
        %768 = vmatmul.mubr.f32.gmra.mrb[0].mxu0 %v522
        %v769 = vpop.f32.mrb[0].mxu0
        %v770 = vadd.f32 0.0, %v769
        %v771 = vpop.f32.mrb[0].mxu0
        %772 = vmatprep.mubr.f32.mxu0 0.0
        %773 = vmatmul.mubr.f32.gmra.mrb[0].mxu0 %v525
        %v774 = vpop.f32.mrb[0].mxu0
        %v775 = vadd.f32 0.0, %v774
        %v776 = vpop.f32.mrb[0].mxu0
        %777 = vmatprep.mubr.f32.mxu0 0.0
        %778 = vmatmul.mubr.f32.gmra.mrb[0].mxu0 %v528
        %v779 = vpop.f32.mrb[0].mxu0
        %v780 = vadd.f32 0.0, %v779
        %v781 = vpop.f32.mrb[0].mxu0
        %782 = vmatprep.mubr.f32.mxu0 0.0
        %783 = vmatmul.mubr.f32.gmra.mrb[0].mxu0 %v531
        %v784 = vpop.f32.mrb[0].mxu0
        %v785 = vadd.f32 0.0, %v784
        %v786 = vpop.f32.mrb[0].mxu0
        %787 = vmatprep.mubr.f32.mxu0 0.0
        %788 = vmatmul.mubr.f32.gmra.mrb[0].mxu0 %v534
        %v789 = vpop.f32.mrb[0].mxu0
        %v790 = vadd.f32 0.0, %v789
        %v791 = vpop.f32.mrb[0].mxu0
        %792 = vmatprep.mubr.f32.mxu0 0.0
        %793 = vmatmul.mubr.f32.gmra.mrb[0].mxu0 %v537
        %v794 = vpop.f32.mrb[0].mxu0
        %v795 = vadd.f32 0.0, %v794
        %v796 = vpop.f32.mrb[0].mxu0
        %797 = vmatprep.mubr.f32.mxu0 0.0
        %798 = vmatmul.mubr.f32.gmra.mrb[0].mxu0 %v540
        %v799 = vpop.f32.mrb[0].mxu0
        %v800 = vadd.f32 0.0, %v799
        %v801 = vpop.f32.mrb[0].mxu0
        %802 = vmatprep.mubr.f32.mxu0 0.0
        %803 = vmatmul.mubr.f32.gmra.mrb[0].mxu0 %v543
        %v804 = vpop.f32.mrb[0].mxu0
        %v805 = vadd.f32 0.0, %v804
        %v806 = vpop.f32.mrb[0].mxu0
        %807 = vmatprep.mubr.f32.mxu0 0.0
        %808 = vmatmul.mubr.f32.gmra.mrb[0].mxu0 %v546
        %v809 = vpop.f32.mrb[0].mxu0
        %v810 = vadd.f32 0.0, %v809
        %v811 = vpop.f32.mrb[0].mxu0
        %812 = vmatprep.mubr.f32.mxu0 0.0
        %813 = vmatmul.mubr.f32.gmra.mrb[0].mxu0 %v549
        %v814 = vpop.f32.mrb[0].mxu0
        %v815 = vadd.f32 0.0, %v814
        %v816 = vpop.f32.mrb[0].mxu0
        %817 = vmatprep.mubr.f32.mxu0 0.0
        %818 = vmatmul.mubr.f32.gmra.mrb[0].mxu0 %v552
        %v819 = vpop.f32.mrb[0].mxu0
        %v820 = vadd.f32 0.0, %v819
        %v821 = vpop.f32.mrb[0].mxu0
        %822 = vmatprep.mubr.f32.mxu0 0.0
        %823 = vmatmul.mubr.f32.gmra.mrb[0].mxu0 %v555
        %v824 = vpop.f32.mrb[0].mxu0
        %v825 = vadd.f32 0.0, %v824
        %v826 = vpop.f32.mrb[0].mxu0
        %827 = vmatprep.mubr.f32.mxu0 0.0
        %828 = vmatmul.mubr.f32.gmra.mrb[0].mxu0 %v558
        %v829 = vpop.f32.mrb[0].mxu0
        %v830 = vadd.f32 0.0, %v829
        %v831 = vpop.f32.mrb[0].mxu0
        %832 = vdwg.mxu0
        %v833 = vmul.f32 %v675, 14.285714
        %v834 = vmul.f32 %v680, 14.285714
        %v835 = vmul.f32 %v685, 14.285714
        %v836 = vmul.f32 %v690, 14.285714
        %v837 = vmul.f32 %v695, 14.285714
        %v838 = vmul.f32 %v700, 14.285714
        %v839 = vmul.f32 %v705, 14.285714
        %v840 = vmul.f32 %v710, 14.285714
        %v841 = vmul.f32 %v715, 14.285714
        %v842 = vmul.f32 %v720, 14.285714
        %v843 = vmul.f32 %v725, 14.285714
        %v844 = vmul.f32 %v730, 14.285714
        %v845 = vmul.f32 %v735, 14.285714
        %v846 = vmul.f32 %v740, 14.285714
        %v847 = vmul.f32 %v745, 14.285714
        %v848 = vmul.f32 %v750, 14.285714
        %v849 = vmul.f32 %v755, 14.285714
        %v850 = vmul.f32 %v760, 14.285714
        %v851 = vmul.f32 %v765, 14.285714
        %v852 = vmul.f32 %v770, 14.285714
        %v853 = vmul.f32 %v775, 14.285714
        %v854 = vmul.f32 %v780, 14.285714
        %v855 = vmul.f32 %v785, 14.285714
        %v856 = vmul.f32 %v790, 14.285714
        %v857 = vmul.f32 %v795, 14.285714
        %v858 = vmul.f32 %v800, 14.285714
        %v859 = vmul.f32 %v805, 14.285714
        %v860 = vmul.f32 %v810, 14.285714
        %v861 = vmul.f32 %v815, 14.285714
        %v862 = vmul.f32 %v820, 14.285714
        %v863 = vmul.f32 %v825, 14.285714
        %v864 = vmul.f32 %v830, 14.285714
        %v865 = vmul.f32 %v833, 1.442695
        %v866 = vpow.pop %v865
        %v867 = vmul.f32 %v834, 1.442695
        %v868 = vpow.pop %v867
        %v869 = vmul.f32 %v835, 1.442695
        %v870 = vpow.pop %v869
        %v871 = vmul.f32 %v836, 1.442695
        %v872 = vpow.pop %v871
        %v873 = vmul.f32 %v837, 1.442695
        %v874 = vpow.pop %v873
        %v875 = vmul.f32 %v838, 1.442695
        %v876 = vpow.pop %v875
        %v877 = vmul.f32 %v839, 1.442695
        %v878 = vpow.pop %v877
        %v879 = vmul.f32 %v840, 1.442695
        %v880 = vpow.pop %v879
        %v881 = vmul.f32 %v841, 1.442695
        %v882 = vpow.pop %v881
        %v883 = vmul.f32 %v842, 1.442695
        %v884 = vpow.pop %v883
        %v885 = vmul.f32 %v843, 1.442695
        %v886 = vpow.pop %v885
        %v887 = vmul.f32 %v844, 1.442695
        %v888 = vpow.pop %v887
        %v889 = vmul.f32 %v845, 1.442695
        %v890 = vpow.pop %v889
        %v891 = vmul.f32 %v846, 1.442695
        %v892 = vpow.pop %v891
        %v893 = vmul.f32 %v847, 1.442695
        %v894 = vpow.pop %v893
        %v895 = vmul.f32 %v848, 1.442695
        %v896 = vpow.pop %v895
        %v897 = vmul.f32 %v849, 1.442695
        %v898 = vpow.pop %v897
        %v899 = vmul.f32 %v850, 1.442695
        %v900 = vpow.pop %v899
        %v901 = vmul.f32 %v851, 1.442695
        %v902 = vpow.pop %v901
        %v903 = vmul.f32 %v852, 1.442695
        %v904 = vpow.pop %v903
        %v905 = vmul.f32 %v853, 1.442695
        %v906 = vpow.pop %v905
        %v907 = vmul.f32 %v854, 1.442695
        %v908 = vpow.pop %v907
        %v909 = vmul.f32 %v855, 1.442695
        %v910 = vpow.pop %v909
        %v911 = vmul.f32 %v856, 1.442695
        %v912 = vpow.pop %v911
        %v913 = vmul.f32 %v857, 1.442695
        %v914 = vpow.pop %v913
        %v915 = vmul.f32 %v858, 1.442695
        %v916 = vpow.pop %v915
        %v917 = vmul.f32 %v859, 1.442695
        %v918 = vpow.pop %v917
        %v919 = vmul.f32 %v860, 1.442695
        %v920 = vpow.pop %v919
        %v921 = vmul.f32 %v861, 1.442695
        %v922 = vpow.pop %v921
        %v923 = vmul.f32 %v862, 1.442695
        %v924 = vpow.pop %v923
        %v925 = vmul.f32 %v863, 1.442695
        %v926 = vpow.pop %v925
        %v927 = vmul.f32 %v864, 1.442695
        %v928 = vpow.pop %v927
        %v930 = vsel %vm463, %v431, 0
        %v933 = vsel %vm463, %v432, 0
        %v936 = vsel %vm463, %v433, 0
        %v939 = vsel %vm463, %v434, 0
        %v942 = vsel %vm463, %v435, 0
        %v945 = vsel %vm463, %v436, 0
        %v948 = vsel %vm463, %v437, 0
        %v951 = vsel %vm463, %v438, 0
        %v954 = vsel %vm463, %v439, 0
        %v957 = vsel %vm463, %v440, 0
        %v960 = vsel %vm463, %v441, 0
        %v963 = vsel %vm463, %v442, 0
        %v966 = vsel %vm463, %v443, 0
        %v969 = vsel %vm463, %v444, 0
        %v972 = vsel %vm463, %v445, 0
        %v975 = vsel %vm463, %v446, 0
        %v978 = vsel %vm463, %v447, 0
        %v981 = vsel %vm463, %v448, 0
        %v984 = vsel %vm463, %v449, 0
        %v987 = vsel %vm463, %v450, 0
        %v990 = vsel %vm463, %v451, 0
        %v993 = vsel %vm463, %v452, 0
        %v996 = vsel %vm463, %v453, 0
        %v999 = vsel %vm463, %v454, 0
        %v1002 = vsel %vm463, %v455, 0
        %v1005 = vsel %vm463, %v456, 0
        %v1008 = vsel %vm463, %v457, 0
        %v1011 = vsel %vm463, %v458, 0
        %v1014 = vsel %vm463, %v459, 0
        %v1017 = vsel %vm463, %v460, 0
        %v1020 = vsel %vm463, %v461, 0
        %v1023 = vsel %vm463, %v462, 0
        %v1026 = vsel %vm463, %v383, 0
        %v1029 = vsel %vm463, %v384, 0
        %v1032 = vsel %vm463, %v385, 0
        %v1035 = vsel %vm463, %v386, 0
        %v1038 = vsel %vm463, %v387, 0
        %v1041 = vsel %vm463, %v388, 0
        %v1044 = vsel %vm463, %v389, 0
        %v1047 = vsel %vm463, %v390, 0
        %v1050 = vsel %vm463, %v391, 0
        %v1053 = vsel %vm463, %v392, 0
        %v1056 = vsel %vm463, %v393, 0
        %v1059 = vsel %vm463, %v394, 0
        %v1062 = vsel %vm463, %v395, 0
        %v1065 = vsel %vm463, %v396, 0
        %v1068 = vsel %vm463, %v397, 0
        %v1071 = vsel %vm463, %v398, 0
        %1073 = vmatprep.subr.mxu0 0.0
        %1074 = vmatpush1.xpose.msra.mxu0 %v1026
        %1075 = vmatprep.subr.mxu0 0.0
        %1076 = vmatpush1.xpose.msra.mxu0 %v1029
        %1077 = vmatprep.subr.mxu0 0.0
        %1078 = vmatpush1.xpose.msra.mxu0 %v1032
        %1079 = vmatprep.subr.mxu0 0.0
        %1080 = vmatpush1.xpose.msra.mxu0 %v1035
        %1081 = vmatprep.subr.mxu0 0.0
        %1082 = vmatpush1.xpose.msra.mxu0 %v1038
        %1083 = vmatprep.subr.mxu0 0.0
        %1084 = vmatpush1.xpose.msra.mxu0 %v1041
        %1085 = vmatprep.subr.mxu0 0.0
        %1086 = vmatpush1.xpose.msra.mxu0 %v1044
        %1087 = vmatprep.subr.mxu0 0.0
        %1088 = vmatpush1.xpose.msra.mxu0 %v1047
        %1089 = vmatprep.subr.mxu0 0.0
        %1090 = vmatpush1.xpose.msra.mxu0 %v1050
        %1091 = vmatprep.subr.mxu0 0.0
        %1092 = vmatpush1.xpose.msra.mxu0 %v1053
        %1093 = vmatprep.subr.mxu0 0.0
        %1094 = vmatpush1.xpose.msra.mxu0 %v1056
        %1095 = vmatprep.subr.mxu0 0.0
        %1096 = vmatpush1.xpose.msra.mxu0 %v1059
        %1097 = vmatprep.subr.mxu0 0.0
        %1098 = vmatpush1.xpose.msra.mxu0 %v1062
        %1099 = vmatprep.subr.mxu0 0.0
        %1100 = vmatpush1.xpose.msra.mxu0 %v1065
        %1101 = vmatprep.subr.mxu0 0.0
        %1102 = vmatpush1.xpose.msra.mxu0 %v1068
        %1103 = vmatprep.subr.mxu0 0.0
        %1104 = vmatpush1.xpose.msra.mxu0 %v1071
        %1105 = vmatprep.subr.mxu0 0.0
        %1106 = vmatpush1.xpose.msra.mxu0 0.0
        %1107 = vmatprep.subr.mxu0 0.0
        %1108 = vmatpush1.xpose.msra.mxu0 0.0
        %1109 = vmatprep.subr.mxu0 0.0
        %1110 = vmatpush1.xpose.msra.mxu0 0.0
        %1111 = vmatprep.subr.mxu0 0.0
        %1112 = vmatpush1.xpose.msra.mxu0 0.0
        %1113 = vmatprep.subr.mxu0 0.0
        %1114 = vmatpush1.xpose.msra.mxu0 0.0
        %1115 = vmatprep.subr.mxu0 0.0
        %1116 = vmatpush1.xpose.msra.mxu0 0.0
        %1117 = vmatprep.subr.mxu0 0.0
        %1118 = vmatpush1.xpose.msra.mxu0 0.0
        %1119 = vmatprep.subr.mxu0 0.0
        %1120 = vmatpush1.xpose.msra.mxu0 0.0
        %1121 = vmatprep.subr.mxu0 0.0
        %1122 = vmatpush1.xpose.msra.mxu0 0.0
        %1123 = vmatprep.subr.mxu0 0.0
        %1124 = vmatpush1.xpose.msra.mxu0 0.0
        %1125 = vmatprep.subr.mxu0 0.0
        %1126 = vmatpush1.xpose.msra.mxu0 0.0
        %1127 = vmatprep.subr.mxu0 0.0
        %1128 = vmatpush1.xpose.msra.mxu0 0.0
        %1129 = vmatprep.subr.mxu0 0.0
        %1130 = vmatpush1.xpose.msra.mxu0 0.0
        %1131 = vmatprep.subr.mxu0 0.0
        %1132 = vmatpush1.xpose.msra.mxu0 0.0
        %1133 = vmatprep.subr.mxu0 0.0
        %1134 = vmatpush1.xpose.msra.mxu0 0.0
        %1135 = vmatprep.subr.mxu0 0.0
        %1136 = vmatpush1.xpose.msra.mxu0 0.0
        %1137 = vmatprep.mubr.f32.mxu0 0.0
        %1138 = vmatmul.mubr.f32.gmra.mrb[0].mxu0 %v930
        %v1139 = vpop.f32.mrb[0].mxu0
        %v1140 = vadd.f32 0.0, %v1139
        %v1141 = vpop.f32.mrb[0].mxu0
        %1142 = vmatprep.mubr.f32.mxu0 0.0
        %1143 = vmatmul.mubr.f32.gmra.mrb[0].mxu0 %v933
        %v1144 = vpop.f32.mrb[0].mxu0
        %v1145 = vadd.f32 0.0, %v1144
        %v1146 = vpop.f32.mrb[0].mxu0
        %1147 = vmatprep.mubr.f32.mxu0 0.0
        %1148 = vmatmul.mubr.f32.gmra.mrb[0].mxu0 %v936
        %v1149 = vpop.f32.mrb[0].mxu0
        %v1150 = vadd.f32 0.0, %v1149
        %v1151 = vpop.f32.mrb[0].mxu0
        %1152 = vmatprep.mubr.f32.mxu0 0.0
        %1153 = vmatmul.mubr.f32.gmra.mrb[0].mxu0 %v939
        %v1154 = vpop.f32.mrb[0].mxu0
        %v1155 = vadd.f32 0.0, %v1154
        %v1156 = vpop.f32.mrb[0].mxu0
        %1157 = vmatprep.mubr.f32.mxu0 0.0
        %1158 = vmatmul.mubr.f32.gmra.mrb[0].mxu0 %v942
        %v1159 = vpop.f32.mrb[0].mxu0
        %v1160 = vadd.f32 0.0, %v1159
        %v1161 = vpop.f32.mrb[0].mxu0
        %1162 = vmatprep.mubr.f32.mxu0 0.0
        %1163 = vmatmul.mubr.f32.gmra.mrb[0].mxu0 %v945
        %v1164 = vpop.f32.mrb[0].mxu0
        %v1165 = vadd.f32 0.0, %v1164
        %v1166 = vpop.f32.mrb[0].mxu0
        %1167 = vmatprep.mubr.f32.mxu0 0.0
        %1168 = vmatmul.mubr.f32.gmra.mrb[0].mxu0 %v948
        %v1169 = vpop.f32.mrb[0].mxu0
        %v1170 = vadd.f32 0.0, %v1169
        %v1171 = vpop.f32.mrb[0].mxu0
        %1172 = vmatprep.mubr.f32.mxu0 0.0
        %1173 = vmatmul.mubr.f32.gmra.mrb[0].mxu0 %v951
        %v1174 = vpop.f32.mrb[0].mxu0
        %v1175 = vadd.f32 0.0, %v1174
        %v1176 = vpop.f32.mrb[0].mxu0
        %1177 = vmatprep.mubr.f32.mxu0 0.0
        %1178 = vmatmul.mubr.f32.gmra.mrb[0].mxu0 %v954
        %v1179 = vpop.f32.mrb[0].mxu0
        %v1180 = vadd.f32 0.0, %v1179
        %v1181 = vpop.f32.mrb[0].mxu0
        %1182 = vmatprep.mubr.f32.mxu0 0.0
        %1183 = vmatmul.mubr.f32.gmra.mrb[0].mxu0 %v957
        %v1184 = vpop.f32.mrb[0].mxu0
        %v1185 = vadd.f32 0.0, %v1184
        %v1186 = vpop.f32.mrb[0].mxu0
        %1187 = vmatprep.mubr.f32.mxu0 0.0
        %1188 = vmatmul.mubr.f32.gmra.mrb[0].mxu0 %v960
        %v1189 = vpop.f32.mrb[0].mxu0
        %v1190 = vadd.f32 0.0, %v1189
        %v1191 = vpop.f32.mrb[0].mxu0
        %1192 = vmatprep.mubr.f32.mxu0 0.0
        %1193 = vmatmul.mubr.f32.gmra.mrb[0].mxu0 %v963
        %v1194 = vpop.f32.mrb[0].mxu0
        %v1195 = vadd.f32 0.0, %v1194
        %v1196 = vpop.f32.mrb[0].mxu0
        %1197 = vmatprep.mubr.f32.mxu0 0.0
        %1198 = vmatmul.mubr.f32.gmra.mrb[0].mxu0 %v966
        %v1199 = vpop.f32.mrb[0].mxu0
        %v1200 = vadd.f32 0.0, %v1199
        %v1201 = vpop.f32.mrb[0].mxu0
        %1202 = vmatprep.mubr.f32.mxu0 0.0
        %1203 = vmatmul.mubr.f32.gmra.mrb[0].mxu0 %v969
        %v1204 = vpop.f32.mrb[0].mxu0
        %v1205 = vadd.f32 0.0, %v1204
        %v1206 = vpop.f32.mrb[0].mxu0
        %1207 = vmatprep.mubr.f32.mxu0 0.0
        %1208 = vmatmul.mubr.f32.gmra.mrb[0].mxu0 %v972
        %v1209 = vpop.f32.mrb[0].mxu0
        %v1210 = vadd.f32 0.0, %v1209
        %v1211 = vpop.f32.mrb[0].mxu0
        %1212 = vmatprep.mubr.f32.mxu0 0.0
        %1213 = vmatmul.mubr.f32.gmra.mrb[0].mxu0 %v975
        %v1214 = vpop.f32.mrb[0].mxu0
        %v1215 = vadd.f32 0.0, %v1214
        %v1216 = vpop.f32.mrb[0].mxu0
        %1217 = vmatprep.mubr.f32.mxu0 0.0
        %1218 = vmatmul.mubr.f32.gmra.mrb[0].mxu0 %v978
        %v1219 = vpop.f32.mrb[0].mxu0
        %v1220 = vadd.f32 0.0, %v1219
        %v1221 = vpop.f32.mrb[0].mxu0
        %1222 = vmatprep.mubr.f32.mxu0 0.0
        %1223 = vmatmul.mubr.f32.gmra.mrb[0].mxu0 %v981
        %v1224 = vpop.f32.mrb[0].mxu0
        %v1225 = vadd.f32 0.0, %v1224
        %v1226 = vpop.f32.mrb[0].mxu0
        %1227 = vmatprep.mubr.f32.mxu0 0.0
        %1228 = vmatmul.mubr.f32.gmra.mrb[0].mxu0 %v984
        %v1229 = vpop.f32.mrb[0].mxu0
        %v1230 = vadd.f32 0.0, %v1229
        %v1231 = vpop.f32.mrb[0].mxu0
        %1232 = vmatprep.mubr.f32.mxu0 0.0
        %1233 = vmatmul.mubr.f32.gmra.mrb[0].mxu0 %v987
        %v1234 = vpop.f32.mrb[0].mxu0
        %v1235 = vadd.f32 0.0, %v1234
        %v1236 = vpop.f32.mrb[0].mxu0
        %1237 = vmatprep.mubr.f32.mxu0 0.0
        %1238 = vmatmul.mubr.f32.gmra.mrb[0].mxu0 %v990
        %v1239 = vpop.f32.mrb[0].mxu0
        %v1240 = vadd.f32 0.0, %v1239
        %v1241 = vpop.f32.mrb[0].mxu0
        %1242 = vmatprep.mubr.f32.mxu0 0.0
        %1243 = vmatmul.mubr.f32.gmra.mrb[0].mxu0 %v993
        %v1244 = vpop.f32.mrb[0].mxu0
        %v1245 = vadd.f32 0.0, %v1244
        %v1246 = vpop.f32.mrb[0].mxu0
        %1247 = vmatprep.mubr.f32.mxu0 0.0
        %1248 = vmatmul.mubr.f32.gmra.mrb[0].mxu0 %v996
        %v1249 = vpop.f32.mrb[0].mxu0
        %v1250 = vadd.f32 0.0, %v1249
        %v1251 = vpop.f32.mrb[0].mxu0
        %1252 = vmatprep.mubr.f32.mxu0 0.0
        %1253 = vmatmul.mubr.f32.gmra.mrb[0].mxu0 %v999
        %v1254 = vpop.f32.mrb[0].mxu0
        %v1255 = vadd.f32 0.0, %v1254
        %v1256 = vpop.f32.mrb[0].mxu0
        %1257 = vmatprep.mubr.f32.mxu0 0.0
        %1258 = vmatmul.mubr.f32.gmra.mrb[0].mxu0 %v1002
        %v1259 = vpop.f32.mrb[0].mxu0
        %v1260 = vadd.f32 0.0, %v1259
        %v1261 = vpop.f32.mrb[0].mxu0
        %1262 = vmatprep.mubr.f32.mxu0 0.0
        %1263 = vmatmul.mubr.f32.gmra.mrb[0].mxu0 %v1005
        %v1264 = vpop.f32.mrb[0].mxu0
        %v1265 = vadd.f32 0.0, %v1264
        %v1266 = vpop.f32.mrb[0].mxu0
        %1267 = vmatprep.mubr.f32.mxu0 0.0
        %1268 = vmatmul.mubr.f32.gmra.mrb[0].mxu0 %v1008
        %v1269 = vpop.f32.mrb[0].mxu0
        %v1270 = vadd.f32 0.0, %v1269
        %v1271 = vpop.f32.mrb[0].mxu0
        %1272 = vmatprep.mubr.f32.mxu0 0.0
        %1273 = vmatmul.mubr.f32.gmra.mrb[0].mxu0 %v1011
        %v1274 = vpop.f32.mrb[0].mxu0
        %v1275 = vadd.f32 0.0, %v1274
        %v1276 = vpop.f32.mrb[0].mxu0
        %1277 = vmatprep.mubr.f32.mxu0 0.0
        %1278 = vmatmul.mubr.f32.gmra.mrb[0].mxu0 %v1014
        %v1279 = vpop.f32.mrb[0].mxu0
        %v1280 = vadd.f32 0.0, %v1279
        %v1281 = vpop.f32.mrb[0].mxu0
        %1282 = vmatprep.mubr.f32.mxu0 0.0
        %1283 = vmatmul.mubr.f32.gmra.mrb[0].mxu0 %v1017
        %v1284 = vpop.f32.mrb[0].mxu0
        %v1285 = vadd.f32 0.0, %v1284
        %v1286 = vpop.f32.mrb[0].mxu0
        %1287 = vmatprep.mubr.f32.mxu0 0.0
        %1288 = vmatmul.mubr.f32.gmra.mrb[0].mxu0 %v1020
        %v1289 = vpop.f32.mrb[0].mxu0
        %v1290 = vadd.f32 0.0, %v1289
        %v1291 = vpop.f32.mrb[0].mxu0
        %1292 = vmatprep.mubr.f32.mxu0 0.0
        %1293 = vmatmul.mubr.f32.gmra.mrb[0].mxu0 %v1023
        %v1294 = vpop.f32.mrb[0].mxu0
        %v1295 = vadd.f32 0.0, %v1294
        %v1296 = vpop.f32.mrb[0].mxu0
        %1297 = vdwg.mxu0
        %v1298 = vmul.f32 %v1140, 14.285714
        %v1299 = vmul.f32 %v1145, 14.285714
        %v1300 = vmul.f32 %v1150, 14.285714
        %v1301 = vmul.f32 %v1155, 14.285714
        %v1302 = vmul.f32 %v1160, 14.285714
        %v1303 = vmul.f32 %v1165, 14.285714
        %v1304 = vmul.f32 %v1170, 14.285714
        %v1305 = vmul.f32 %v1175, 14.285714
        %v1306 = vmul.f32 %v1180, 14.285714
        %v1307 = vmul.f32 %v1185, 14.285714
        %v1308 = vmul.f32 %v1190, 14.285714
        %v1309 = vmul.f32 %v1195, 14.285714
        %v1310 = vmul.f32 %v1200, 14.285714
        %v1311 = vmul.f32 %v1205, 14.285714
        %v1312 = vmul.f32 %v1210, 14.285714
        %v1313 = vmul.f32 %v1215, 14.285714
        %v1314 = vmul.f32 %v1220, 14.285714
        %v1315 = vmul.f32 %v1225, 14.285714
        %v1316 = vmul.f32 %v1230, 14.285714
        %v1317 = vmul.f32 %v1235, 14.285714
        %v1318 = vmul.f32 %v1240, 14.285714
        %v1319 = vmul.f32 %v1245, 14.285714
        %v1320 = vmul.f32 %v1250, 14.285714
        %v1321 = vmul.f32 %v1255, 14.285714
        %v1322 = vmul.f32 %v1260, 14.285714
        %v1323 = vmul.f32 %v1265, 14.285714
        %v1324 = vmul.f32 %v1270, 14.285714
        %v1325 = vmul.f32 %v1275, 14.285714
        %v1326 = vmul.f32 %v1280, 14.285714
        %v1327 = vmul.f32 %v1285, 14.285714
        %v1328 = vmul.f32 %v1290, 14.285714
        %v1329 = vmul.f32 %v1295, 14.285714
        %v1330 = vmul.f32 %v1298, 1.442695
        %v1331 = vpow.pop %v1330
        %v1332 = vmul.f32 %v1299, 1.442695
        %v1333 = vpow.pop %v1332
        %v1334 = vmul.f32 %v1300, 1.442695
        %v1335 = vpow.pop %v1334
        %v1336 = vmul.f32 %v1301, 1.442695
        %v1337 = vpow.pop %v1336
        %v1338 = vmul.f32 %v1302, 1.442695
        %v1339 = vpow.pop %v1338
        %v1340 = vmul.f32 %v1303, 1.442695
        %v1341 = vpow.pop %v1340
        %v1342 = vmul.f32 %v1304, 1.442695
        %v1343 = vpow.pop %v1342
        %v1344 = vmul.f32 %v1305, 1.442695
        %v1345 = vpow.pop %v1344
        %v1346 = vmul.f32 %v1306, 1.442695
        %v1347 = vpow.pop %v1346
        %v1348 = vmul.f32 %v1307, 1.442695
        %v1349 = vpow.pop %v1348
        %v1350 = vmul.f32 %v1308, 1.442695
        %v1351 = vpow.pop %v1350
        %v1352 = vmul.f32 %v1309, 1.442695
        %v1353 = vpow.pop %v1352
        %v1354 = vmul.f32 %v1310, 1.442695
        %v1355 = vpow.pop %v1354
        %v1356 = vmul.f32 %v1311, 1.442695
        %v1357 = vpow.pop %v1356
        %v1358 = vmul.f32 %v1312, 1.442695
        %v1359 = vpow.pop %v1358
        %v1360 = vmul.f32 %v1313, 1.442695
        %v1361 = vpow.pop %v1360
        %v1362 = vmul.f32 %v1314, 1.442695
        %v1363 = vpow.pop %v1362
        %v1364 = vmul.f32 %v1315, 1.442695
        %v1365 = vpow.pop %v1364
        %v1366 = vmul.f32 %v1316, 1.442695
        %v1367 = vpow.pop %v1366
        %v1368 = vmul.f32 %v1317, 1.442695
        %v1369 = vpow.pop %v1368
        %v1370 = vmul.f32 %v1318, 1.442695
        %v1371 = vpow.pop %v1370
        %v1372 = vmul.f32 %v1319, 1.442695
        %v1373 = vpow.pop %v1372
        %v1374 = vmul.f32 %v1320, 1.442695
        %v1375 = vpow.pop %v1374
        %v1376 = vmul.f32 %v1321, 1.442695
        %v1377 = vpow.pop %v1376
        %v1378 = vmul.f32 %v1322, 1.442695
        %v1379 = vpow.pop %v1378
        %v1380 = vmul.f32 %v1323, 1.442695
        %v1381 = vpow.pop %v1380
        %v1382 = vmul.f32 %v1324, 1.442695
        %v1383 = vpow.pop %v1382
        %v1384 = vmul.f32 %v1325, 1.442695
        %v1385 = vpow.pop %v1384
        %v1386 = vmul.f32 %v1326, 1.442695
        %v1387 = vpow.pop %v1386
        %v1388 = vmul.f32 %v1327, 1.442695
        %v1389 = vpow.pop %v1388
        %v1390 = vmul.f32 %v1328, 1.442695
        %v1391 = vpow.pop %v1390
        %v1392 = vmul.f32 %v1329, 1.442695
        %v1393 = vpow.pop %v1392
        %1394 = vmatprep.subr.mxu0 0.0
        %1395 = vmatpush1.xpose.msra.mxu0 %v561
        %1396 = vmatprep.subr.mxu0 0.0
        %1397 = vmatpush1.xpose.msra.mxu0 %v564
        %1398 = vmatprep.subr.mxu0 0.0
        %1399 = vmatpush1.xpose.msra.mxu0 %v567
        %1400 = vmatprep.subr.mxu0 0.0
        %1401 = vmatpush1.xpose.msra.mxu0 %v570
        %1402 = vmatprep.subr.mxu0 0.0
        %1403 = vmatpush1.xpose.msra.mxu0 %v573
        %1404 = vmatprep.subr.mxu0 0.0
        %1405 = vmatpush1.xpose.msra.mxu0 %v576
        %1406 = vmatprep.subr.mxu0 0.0
        %1407 = vmatpush1.xpose.msra.mxu0 %v579
        %1408 = vmatprep.subr.mxu0 0.0
        %1409 = vmatpush1.xpose.msra.mxu0 %v582
        %1410 = vmatprep.subr.mxu0 0.0
        %1411 = vmatpush1.xpose.msra.mxu0 %v585
        %1412 = vmatprep.subr.mxu0 0.0
        %1413 = vmatpush1.xpose.msra.mxu0 %v588
        %1414 = vmatprep.subr.mxu0 0.0
        %1415 = vmatpush1.xpose.msra.mxu0 %v591
        %1416 = vmatprep.subr.mxu0 0.0
        %1417 = vmatpush1.xpose.msra.mxu0 %v594
        %1418 = vmatprep.subr.mxu0 0.0
        %1419 = vmatpush1.xpose.msra.mxu0 %v597
        %1420 = vmatprep.subr.mxu0 0.0
        %1421 = vmatpush1.xpose.msra.mxu0 %v600
        %1422 = vmatprep.subr.mxu0 0.0
        %1423 = vmatpush1.xpose.msra.mxu0 %v603
        %1424 = vmatprep.subr.mxu0 0.0
        %1425 = vmatpush1.xpose.msra.mxu0 %v606
        %1426 = vmatprep.subr.mxu0 0.0
        %1427 = vmatpush1.xpose.msra.mxu0 0.0
        %1428 = vmatprep.subr.mxu0 0.0
        %1429 = vmatpush1.xpose.msra.mxu0 0.0
        %1430 = vmatprep.subr.mxu0 0.0
        %1431 = vmatpush1.xpose.msra.mxu0 0.0
        %1432 = vmatprep.subr.mxu0 0.0
        %1433 = vmatpush1.xpose.msra.mxu0 0.0
        %1434 = vmatprep.subr.mxu0 0.0
        %1435 = vmatpush1.xpose.msra.mxu0 0.0
        %1436 = vmatprep.subr.mxu0 0.0
        %1437 = vmatpush1.xpose.msra.mxu0 0.0
        %1438 = vmatprep.subr.mxu0 0.0
        %1439 = vmatpush1.xpose.msra.mxu0 0.0
        %1440 = vmatprep.subr.mxu0 0.0
        %1441 = vmatpush1.xpose.msra.mxu0 0.0
        %1442 = vmatprep.subr.mxu0 0.0
        %1443 = vmatpush1.xpose.msra.mxu0 0.0
        %1444 = vmatprep.subr.mxu0 0.0
        %1445 = vmatpush1.xpose.msra.mxu0 0.0
        %1446 = vmatprep.subr.mxu0 0.0
        %1447 = vmatpush1.xpose.msra.mxu0 0.0
        %1448 = vmatprep.subr.mxu0 0.0
        %1449 = vmatpush1.xpose.msra.mxu0 0.0
        %1450 = vmatprep.subr.mxu0 0.0
        %1451 = vmatpush1.xpose.msra.mxu0 0.0
        %1452 = vmatprep.subr.mxu0 0.0
        %1453 = vmatpush1.xpose.msra.mxu0 0.0
        %1454 = vmatprep.subr.mxu0 0.0
        %1455 = vmatpush1.xpose.msra.mxu0 0.0
        %1456 = vmatprep.subr.mxu0 0.0
        %1457 = vmatpush1.xpose.msra.mxu0 0.0
        %1458 = vmatprep.mubr.f32.mxu0 0.0
        %1459 = vmatmul.mubr.f32.gmra.mrb[0].mxu0 %v930
        %v1460 = vpop.f32.mrb[0].mxu0
        %v1461 = vadd.f32 0.0, %v1460
        %v1462 = vpop.f32.mrb[0].mxu0
        %1463 = vmatprep.mubr.f32.mxu0 0.0
        %1464 = vmatmul.mubr.f32.gmra.mrb[0].mxu0 %v933
        %v1465 = vpop.f32.mrb[0].mxu0
        %v1466 = vadd.f32 0.0, %v1465
        %v1467 = vpop.f32.mrb[0].mxu0
        %1468 = vmatprep.mubr.f32.mxu0 0.0
        %1469 = vmatmul.mubr.f32.gmra.mrb[0].mxu0 %v936
        %v1470 = vpop.f32.mrb[0].mxu0
        %v1471 = vadd.f32 0.0, %v1470
        %v1472 = vpop.f32.mrb[0].mxu0
        %1473 = vmatprep.mubr.f32.mxu0 0.0
        %1474 = vmatmul.mubr.f32.gmra.mrb[0].mxu0 %v939
        %v1475 = vpop.f32.mrb[0].mxu0
        %v1476 = vadd.f32 0.0, %v1475
        %v1477 = vpop.f32.mrb[0].mxu0
        %1478 = vmatprep.mubr.f32.mxu0 0.0
        %1479 = vmatmul.mubr.f32.gmra.mrb[0].mxu0 %v942
        %v1480 = vpop.f32.mrb[0].mxu0
        %v1481 = vadd.f32 0.0, %v1480
        %v1482 = vpop.f32.mrb[0].mxu0
        %1483 = vmatprep.mubr.f32.mxu0 0.0
        %1484 = vmatmul.mubr.f32.gmra.mrb[0].mxu0 %v945
        %v1485 = vpop.f32.mrb[0].mxu0
        %v1486 = vadd.f32 0.0, %v1485
        %v1487 = vpop.f32.mrb[0].mxu0
        %1488 = vmatprep.mubr.f32.mxu0 0.0
        %1489 = vmatmul.mubr.f32.gmra.mrb[0].mxu0 %v948
        %v1490 = vpop.f32.mrb[0].mxu0
        %v1491 = vadd.f32 0.0, %v1490
        %v1492 = vpop.f32.mrb[0].mxu0
        %1493 = vmatprep.mubr.f32.mxu0 0.0
        %1494 = vmatmul.mubr.f32.gmra.mrb[0].mxu0 %v951
        %v1495 = vpop.f32.mrb[0].mxu0
        %v1496 = vadd.f32 0.0, %v1495
        %v1497 = vpop.f32.mrb[0].mxu0
        %1498 = vmatprep.mubr.f32.mxu0 0.0
        %1499 = vmatmul.mubr.f32.gmra.mrb[0].mxu0 %v954
        %v1500 = vpop.f32.mrb[0].mxu0
        %v1501 = vadd.f32 0.0, %v1500
        %v1502 = vpop.f32.mrb[0].mxu0
        %1503 = vmatprep.mubr.f32.mxu0 0.0
        %1504 = vmatmul.mubr.f32.gmra.mrb[0].mxu0 %v957
        %v1505 = vpop.f32.mrb[0].mxu0
        %v1506 = vadd.f32 0.0, %v1505
        %v1507 = vpop.f32.mrb[0].mxu0
        %1508 = vmatprep.mubr.f32.mxu0 0.0
        %1509 = vmatmul.mubr.f32.gmra.mrb[0].mxu0 %v960
        %v1510 = vpop.f32.mrb[0].mxu0
        %v1511 = vadd.f32 0.0, %v1510
        %v1512 = vpop.f32.mrb[0].mxu0
        %1513 = vmatprep.mubr.f32.mxu0 0.0
        %1514 = vmatmul.mubr.f32.gmra.mrb[0].mxu0 %v963
        %v1515 = vpop.f32.mrb[0].mxu0
        %v1516 = vadd.f32 0.0, %v1515
        %v1517 = vpop.f32.mrb[0].mxu0
        %1518 = vmatprep.mubr.f32.mxu0 0.0
        %1519 = vmatmul.mubr.f32.gmra.mrb[0].mxu0 %v966
        %v1520 = vpop.f32.mrb[0].mxu0
        %v1521 = vadd.f32 0.0, %v1520
        %v1522 = vpop.f32.mrb[0].mxu0
        %1523 = vmatprep.mubr.f32.mxu0 0.0
        %1524 = vmatmul.mubr.f32.gmra.mrb[0].mxu0 %v969
        %v1525 = vpop.f32.mrb[0].mxu0
        %v1526 = vadd.f32 0.0, %v1525
        %v1527 = vpop.f32.mrb[0].mxu0
        %1528 = vmatprep.mubr.f32.mxu0 0.0
        %1529 = vmatmul.mubr.f32.gmra.mrb[0].mxu0 %v972
        %v1530 = vpop.f32.mrb[0].mxu0
        %v1531 = vadd.f32 0.0, %v1530
        %v1532 = vpop.f32.mrb[0].mxu0
        %1533 = vmatprep.mubr.f32.mxu0 0.0
        %1534 = vmatmul.mubr.f32.gmra.mrb[0].mxu0 %v975
        %v1535 = vpop.f32.mrb[0].mxu0
        %v1536 = vadd.f32 0.0, %v1535
        %v1537 = vpop.f32.mrb[0].mxu0
        %1538 = vmatprep.mubr.f32.mxu0 0.0
        %1539 = vmatmul.mubr.f32.gmra.mrb[0].mxu0 %v978
        %v1540 = vpop.f32.mrb[0].mxu0
        %v1541 = vadd.f32 0.0, %v1540
        %v1542 = vpop.f32.mrb[0].mxu0
        %1543 = vmatprep.mubr.f32.mxu0 0.0
        %1544 = vmatmul.mubr.f32.gmra.mrb[0].mxu0 %v981
        %v1545 = vpop.f32.mrb[0].mxu0
        %v1546 = vadd.f32 0.0, %v1545
        %v1547 = vpop.f32.mrb[0].mxu0
        %1548 = vmatprep.mubr.f32.mxu0 0.0
        %1549 = vmatmul.mubr.f32.gmra.mrb[0].mxu0 %v984
        %v1550 = vpop.f32.mrb[0].mxu0
        %v1551 = vadd.f32 0.0, %v1550
        %v1552 = vpop.f32.mrb[0].mxu0
        %1553 = vmatprep.mubr.f32.mxu0 0.0
        %1554 = vmatmul.mubr.f32.gmra.mrb[0].mxu0 %v987
        %v1555 = vpop.f32.mrb[0].mxu0
        %v1556 = vadd.f32 0.0, %v1555
        %v1557 = vpop.f32.mrb[0].mxu0
        %1558 = vmatprep.mubr.f32.mxu0 0.0
        %1559 = vmatmul.mubr.f32.gmra.mrb[0].mxu0 %v990
        %v1560 = vpop.f32.mrb[0].mxu0
        %v1561 = vadd.f32 0.0, %v1560
        %v1562 = vpop.f32.mrb[0].mxu0
        %1563 = vmatprep.mubr.f32.mxu0 0.0
        %1564 = vmatmul.mubr.f32.gmra.mrb[0].mxu0 %v993
        %v1565 = vpop.f32.mrb[0].mxu0
        %v1566 = vadd.f32 0.0, %v1565
        %v1567 = vpop.f32.mrb[0].mxu0
        %1568 = vmatprep.mubr.f32.mxu0 0.0
        %1569 = vmatmul.mubr.f32.gmra.mrb[0].mxu0 %v996
        %v1570 = vpop.f32.mrb[0].mxu0
        %v1571 = vadd.f32 0.0, %v1570
        %v1572 = vpop.f32.mrb[0].mxu0
        %1573 = vmatprep.mubr.f32.mxu0 0.0
        %1574 = vmatmul.mubr.f32.gmra.mrb[0].mxu0 %v999
        %v1575 = vpop.f32.mrb[0].mxu0
        %v1576 = vadd.f32 0.0, %v1575
        %v1577 = vpop.f32.mrb[0].mxu0
        %1578 = vmatprep.mubr.f32.mxu0 0.0
        %1579 = vmatmul.mubr.f32.gmra.mrb[0].mxu0 %v1002
        %v1580 = vpop.f32.mrb[0].mxu0
        %v1581 = vadd.f32 0.0, %v1580
        %v1582 = vpop.f32.mrb[0].mxu0
        %1583 = vmatprep.mubr.f32.mxu0 0.0
        %1584 = vmatmul.mubr.f32.gmra.mrb[0].mxu0 %v1005
        %v1585 = vpop.f32.mrb[0].mxu0
        %v1586 = vadd.f32 0.0, %v1585
        %v1587 = vpop.f32.mrb[0].mxu0
        %1588 = vmatprep.mubr.f32.mxu0 0.0
        %1589 = vmatmul.mubr.f32.gmra.mrb[0].mxu0 %v1008
        %v1590 = vpop.f32.mrb[0].mxu0
        %v1591 = vadd.f32 0.0, %v1590
        %v1592 = vpop.f32.mrb[0].mxu0
        %1593 = vmatprep.mubr.f32.mxu0 0.0
        %1594 = vmatmul.mubr.f32.gmra.mrb[0].mxu0 %v1011
        %v1595 = vpop.f32.mrb[0].mxu0
        %v1596 = vadd.f32 0.0, %v1595
        %v1597 = vpop.f32.mrb[0].mxu0
        %1598 = vmatprep.mubr.f32.mxu0 0.0
        %1599 = vmatmul.mubr.f32.gmra.mrb[0].mxu0 %v1014
        %v1600 = vpop.f32.mrb[0].mxu0
        %v1601 = vadd.f32 0.0, %v1600
        %v1602 = vpop.f32.mrb[0].mxu0
        %1603 = vmatprep.mubr.f32.mxu0 0.0
        %1604 = vmatmul.mubr.f32.gmra.mrb[0].mxu0 %v1017
        %v1605 = vpop.f32.mrb[0].mxu0
        %v1606 = vadd.f32 0.0, %v1605
        %v1607 = vpop.f32.mrb[0].mxu0
        %1608 = vmatprep.mubr.f32.mxu0 0.0
        %1609 = vmatmul.mubr.f32.gmra.mrb[0].mxu0 %v1020
        %v1610 = vpop.f32.mrb[0].mxu0
        %v1611 = vadd.f32 0.0, %v1610
        %v1612 = vpop.f32.mrb[0].mxu0
        %1613 = vmatprep.mubr.f32.mxu0 0.0
        %1614 = vmatmul.mubr.f32.gmra.mrb[0].mxu0 %v1023
        %v1615 = vpop.f32.mrb[0].mxu0
        %v1616 = vadd.f32 0.0, %v1615
        %v1617 = vpop.f32.mrb[0].mxu0
        %1618 = vdwg.mxu0
        %v1619 = vmul.f32 %v1461, 14.285714
        %v1620 = vmul.f32 %v1466, 14.285714
        %v1621 = vmul.f32 %v1471, 14.285714
        %v1622 = vmul.f32 %v1476, 14.285714
        %v1623 = vmul.f32 %v1481, 14.285714
        %v1624 = vmul.f32 %v1486, 14.285714
        %v1625 = vmul.f32 %v1491, 14.285714
        %v1626 = vmul.f32 %v1496, 14.285714
        %v1627 = vmul.f32 %v1501, 14.285714
        %v1628 = vmul.f32 %v1506, 14.285714
        %v1629 = vmul.f32 %v1511, 14.285714
        %v1630 = vmul.f32 %v1516, 14.285714
        %v1631 = vmul.f32 %v1521, 14.285714
        %v1632 = vmul.f32 %v1526, 14.285714
        %v1633 = vmul.f32 %v1531, 14.285714
        %v1634 = vmul.f32 %v1536, 14.285714
        %v1635 = vmul.f32 %v1541, 14.285714
        %v1636 = vmul.f32 %v1546, 14.285714
        %v1637 = vmul.f32 %v1551, 14.285714
        %v1638 = vmul.f32 %v1556, 14.285714
        %v1639 = vmul.f32 %v1561, 14.285714
        %v1640 = vmul.f32 %v1566, 14.285714
        %v1641 = vmul.f32 %v1571, 14.285714
        %v1642 = vmul.f32 %v1576, 14.285714
        %v1643 = vmul.f32 %v1581, 14.285714
        %v1644 = vmul.f32 %v1586, 14.285714
        %v1645 = vmul.f32 %v1591, 14.285714
        %v1646 = vmul.f32 %v1596, 14.285714
        %v1647 = vmul.f32 %v1601, 14.285714
        %v1648 = vmul.f32 %v1606, 14.285714
        %v1649 = vmul.f32 %v1611, 14.285714
        %v1650 = vmul.f32 %v1616, 14.285714
        %v1651 = vmul.f32 %v1619, 1.442695
        %v1652 = vpow.pop %v1651
        %v1653 = vmul.f32 %v1620, 1.442695
        %v1654 = vpow.pop %v1653
        %v1655 = vmul.f32 %v1621, 1.442695
        %v1656 = vpow.pop %v1655
        %v1657 = vmul.f32 %v1622, 1.442695
        %v1658 = vpow.pop %v1657
        %v1659 = vmul.f32 %v1623, 1.442695
        %v1660 = vpow.pop %v1659
        %v1661 = vmul.f32 %v1624, 1.442695
        %v1662 = vpow.pop %v1661
        %v1663 = vmul.f32 %v1625, 1.442695
        %v1664 = vpow.pop %v1663
        %v1665 = vmul.f32 %v1626, 1.442695
        %v1666 = vpow.pop %v1665
        %v1667 = vmul.f32 %v1627, 1.442695
        %v1668 = vpow.pop %v1667
        %v1669 = vmul.f32 %v1628, 1.442695
        %v1670 = vpow.pop %v1669
        %v1671 = vmul.f32 %v1629, 1.442695
        %v1672 = vpow.pop %v1671
        %v1673 = vmul.f32 %v1630, 1.442695
        %v1674 = vpow.pop %v1673
        %v1675 = vmul.f32 %v1631, 1.442695
        %v1676 = vpow.pop %v1675
        %v1677 = vmul.f32 %v1632, 1.442695
        %v1678 = vpow.pop %v1677
        %v1679 = vmul.f32 %v1633, 1.442695
        %v1680 = vpow.pop %v1679
        %v1681 = vmul.f32 %v1634, 1.442695
        %v1682 = vpow.pop %v1681
        %v1683 = vmul.f32 %v1635, 1.442695
        %v1684 = vpow.pop %v1683
        %v1685 = vmul.f32 %v1636, 1.442695
        %v1686 = vpow.pop %v1685
        %v1687 = vmul.f32 %v1637, 1.442695
        %v1688 = vpow.pop %v1687
        %v1689 = vmul.f32 %v1638, 1.442695
        %v1690 = vpow.pop %v1689
        %v1691 = vmul.f32 %v1639, 1.442695
        %v1692 = vpow.pop %v1691
        %v1693 = vmul.f32 %v1640, 1.442695
        %v1694 = vpow.pop %v1693
        %v1695 = vmul.f32 %v1641, 1.442695
        %v1696 = vpow.pop %v1695
        %v1697 = vmul.f32 %v1642, 1.442695
        %v1698 = vpow.pop %v1697
        %v1699 = vmul.f32 %v1643, 1.442695
        %v1700 = vpow.pop %v1699
        %v1701 = vmul.f32 %v1644, 1.442695
        %v1702 = vpow.pop %v1701
        %v1703 = vmul.f32 %v1645, 1.442695
        %v1704 = vpow.pop %v1703
        %v1705 = vmul.f32 %v1646, 1.442695
        %v1706 = vpow.pop %v1705
        %v1707 = vmul.f32 %v1647, 1.442695
        %v1708 = vpow.pop %v1707
        %v1709 = vmul.f32 %v1648, 1.442695
        %v1710 = vpow.pop %v1709
        %v1711 = vmul.f32 %v1649, 1.442695
        %v1712 = vpow.pop %v1711
        %v1713 = vmul.f32 %v1650, 1.442695
        %v1714 = vpow.pop %v1713
        %v1715 = vld [vmem:[#allocation2] sm:$0x1]
        %v1716 = vadd.f32 %v866, %v1652
        %v1717 = vadd.f32 %v868, %v1654
        %v1718 = vadd.f32 %v870, %v1656
        %v1719 = vadd.f32 %v872, %v1658
        %v1720 = vadd.f32 %v874, %v1660
        %v1721 = vadd.f32 %v876, %v1662
        %v1722 = vadd.f32 %v878, %v1664
        %v1723 = vadd.f32 %v880, %v1666
        %v1724 = vadd.f32 %v882, %v1668
        %v1725 = vadd.f32 %v884, %v1670
        %v1726 = vadd.f32 %v886, %v1672
        %v1727 = vadd.f32 %v888, %v1674
        %v1728 = vadd.f32 %v890, %v1676
        %v1729 = vadd.f32 %v892, %v1678
        %v1730 = vadd.f32 %v894, %v1680
        %v1731 = vadd.f32 %v896, %v1682
        %v1732 = vadd.f32 %v898, %v1684
        %v1733 = vadd.f32 %v900, %v1686
        %v1734 = vadd.f32 %v902, %v1688
        %v1735 = vadd.f32 %v904, %v1690
        %v1736 = vadd.f32 %v906, %v1692
        %v1737 = vadd.f32 %v908, %v1694
        %v1738 = vadd.f32 %v910, %v1696
        %v1739 = vadd.f32 %v912, %v1698
        %v1740 = vadd.f32 %v914, %v1700
        %v1741 = vadd.f32 %v916, %v1702
        %v1742 = vadd.f32 %v918, %v1704
        %v1743 = vadd.f32 %v920, %v1706
        %v1744 = vadd.f32 %v922, %v1708
        %v1745 = vadd.f32 %v924, %v1710
        %v1746 = vadd.f32 %v926, %v1712
        %v1747 = vadd.f32 %v928, %v1714
        %v1748 = vadd.f32 %v1716, %v1717
        %v1749 = vadd.f32 %v1748, %v1718
        %v1750 = vadd.f32 %v1749, %v1719
        %v1751 = vadd.f32 %v1750, %v1720
        %v1752 = vadd.f32 %v1751, %v1721
        %v1753 = vadd.f32 %v1752, %v1722
        %v1754 = vadd.f32 %v1753, %v1723
        %v1755 = vadd.f32 %v1754, %v1724
        %v1756 = vadd.f32 %v1755, %v1725
        %v1757 = vadd.f32 %v1756, %v1726
        %v1758 = vadd.f32 %v1757, %v1727
        %v1759 = vadd.f32 %v1758, %v1728
        %v1760 = vadd.f32 %v1759, %v1729
        %v1761 = vadd.f32 %v1760, %v1730
        %v1762 = vadd.f32 %v1761, %v1731
        %v1763 = vadd.f32 %v1762, %v1732
        %v1764 = vadd.f32 %v1763, %v1733
        %v1765 = vadd.f32 %v1764, %v1734
        %v1766 = vadd.f32 %v1765, %v1735
        %v1767 = vadd.f32 %v1766, %v1736
        %v1768 = vadd.f32 %v1767, %v1737
        %v1769 = vadd.f32 %v1768, %v1738
        %v1770 = vadd.f32 %v1769, %v1739
        %v1771 = vadd.f32 %v1770, %v1740
        %v1772 = vadd.f32 %v1771, %v1741
        %v1773 = vadd.f32 %v1772, %v1742
        %v1774 = vadd.f32 %v1773, %v1743
        %v1775 = vadd.f32 %v1774, %v1744
        %v1776 = vadd.f32 %v1775, %v1745
        %v1777 = vadd.f32 %v1776, %v1746
        %v1778 = vadd.f32 %v1777, %v1747
        %v1779 = vrot.slane %v1778, 4
        %v1780 = vadd.f32 %v1778, %v1779
        %v1781 = vrot.slane %v1780, 2
        %v1782 = vadd.f32 %v1780, %v1781
        %v1783 = vrot.slane %v1782, 1
        %v1784 = vadd.f32 %v1782, %v1783
        %v1785 = vadd.f32 %v1715, %v1784
        %1786 = vst [vmem:[#allocation2] sm:$0x1] %v1785
        %v1787 = vld [vmem:[#allocation3] sm:$0x1]
        %v1788 = vadd.f32 %v1331, %v1333
        %v1789 = vadd.f32 %v1788, %v1335
        %v1790 = vadd.f32 %v1789, %v1337
        %v1791 = vadd.f32 %v1790, %v1339
        %v1792 = vadd.f32 %v1791, %v1341
        %v1793 = vadd.f32 %v1792, %v1343
        %v1794 = vadd.f32 %v1793, %v1345
        %v1795 = vadd.f32 %v1794, %v1347
        %v1796 = vadd.f32 %v1795, %v1349
        %v1797 = vadd.f32 %v1796, %v1351
        %v1798 = vadd.f32 %v1797, %v1353
        %v1799 = vadd.f32 %v1798, %v1355
        %v1800 = vadd.f32 %v1799, %v1357
        %v1801 = vadd.f32 %v1800, %v1359
        %v1802 = vadd.f32 %v1801, %v1361
        %v1803 = vadd.f32 %v1802, %v1363
        %v1804 = vadd.f32 %v1803, %v1365
        %v1805 = vadd.f32 %v1804, %v1367
        %v1806 = vadd.f32 %v1805, %v1369
        %v1807 = vadd.f32 %v1806, %v1371
        %v1808 = vadd.f32 %v1807, %v1373
        %v1809 = vadd.f32 %v1808, %v1375
        %v1810 = vadd.f32 %v1809, %v1377
        %v1811 = vadd.f32 %v1810, %v1379
        %v1812 = vadd.f32 %v1811, %v1381
        %v1813 = vadd.f32 %v1812, %v1383
        %v1814 = vadd.f32 %v1813, %v1385
        %v1815 = vadd.f32 %v1814, %v1387
        %v1816 = vadd.f32 %v1815, %v1389
        %v1817 = vadd.f32 %v1816, %v1391
        %v1818 = vadd.f32 %v1817, %v1393
        %v1819 = vrot.slane %v1818, 4
        %v1820 = vadd.f32 %v1818, %v1819
        %v1821 = vrot.slane %v1820, 2
        %v1822 = vadd.f32 %v1820, %v1821
        %v1823 = vrot.slane %v1822, 1
        %v1824 = vadd.f32 %v1822, %v1823
        %v1825 = vadd.f32 %v1787, %v1824
        %1826 = vst [vmem:[#allocation3] sm:$0x1] %v1825
        %1827 = vadd.xlane.f32.xlu0 %v1652
        %v1828 = vpop.xlane.xlu0 %1827
        %1829 = vadd.xlane.f32.xlu0 %v1654
        %v1830 = vpop.xlane.xlu0 %1829
        %1831 = vadd.xlane.f32.xlu0 %v1656
        %v1832 = vpop.xlane.xlu0 %1831
        %1833 = vadd.xlane.f32.xlu0 %v1658
        %v1834 = vpop.xlane.xlu0 %1833
        %1835 = vadd.xlane.f32.xlu0 %v1660
        %v1836 = vpop.xlane.xlu0 %1835
        %1837 = vadd.xlane.f32.xlu0 %v1662
        %v1838 = vpop.xlane.xlu0 %1837
        %1839 = vadd.xlane.f32.xlu0 %v1664
        %v1840 = vpop.xlane.xlu0 %1839
        %1841 = vadd.xlane.f32.xlu0 %v1666
        %v1842 = vpop.xlane.xlu0 %1841
        %1843 = vadd.xlane.f32.xlu0 %v1668
        %v1844 = vpop.xlane.xlu0 %1843
        %1845 = vadd.xlane.f32.xlu0 %v1670
        %v1846 = vpop.xlane.xlu0 %1845
        %1847 = vadd.xlane.f32.xlu0 %v1672
        %v1848 = vpop.xlane.xlu0 %1847
        %1849 = vadd.xlane.f32.xlu0 %v1674
        %v1850 = vpop.xlane.xlu0 %1849
        %1851 = vadd.xlane.f32.xlu0 %v1676
        %v1852 = vpop.xlane.xlu0 %1851
        %1853 = vadd.xlane.f32.xlu0 %v1678
        %v1854 = vpop.xlane.xlu0 %1853
        %1855 = vadd.xlane.f32.xlu0 %v1680
        %v1856 = vpop.xlane.xlu0 %1855
        %1857 = vadd.xlane.f32.xlu0 %v1682
        %v1858 = vpop.xlane.xlu0 %1857
        %1859 = vadd.xlane.f32.xlu0 %v1684
        %v1860 = vpop.xlane.xlu0 %1859
        %1861 = vadd.xlane.f32.xlu0 %v1686
        %v1862 = vpop.xlane.xlu0 %1861
        %1863 = vadd.xlane.f32.xlu0 %v1688
        %v1864 = vpop.xlane.xlu0 %1863
        %1865 = vadd.xlane.f32.xlu0 %v1690
        %v1866 = vpop.xlane.xlu0 %1865
        %1867 = vadd.xlane.f32.xlu0 %v1692
        %v1868 = vpop.xlane.xlu0 %1867
        %1869 = vadd.xlane.f32.xlu0 %v1694
        %v1870 = vpop.xlane.xlu0 %1869
        %1871 = vadd.xlane.f32.xlu0 %v1696
        %v1872 = vpop.xlane.xlu0 %1871
        %1873 = vadd.xlane.f32.xlu0 %v1698
        %v1874 = vpop.xlane.xlu0 %1873
        %1875 = vadd.xlane.f32.xlu0 %v1700
        %v1876 = vpop.xlane.xlu0 %1875
        %1877 = vadd.xlane.f32.xlu0 %v1702
        %v1878 = vpop.xlane.xlu0 %1877
        %1879 = vadd.xlane.f32.xlu0 %v1704
        %v1880 = vpop.xlane.xlu0 %1879
        %1881 = vadd.xlane.f32.xlu0 %v1706
        %v1882 = vpop.xlane.xlu0 %1881
        %1883 = vadd.xlane.f32.xlu0 %v1708
        %v1884 = vpop.xlane.xlu0 %1883
        %1885 = vadd.xlane.f32.xlu0 %v1710
        %v1886 = vpop.xlane.xlu0 %1885
        %1887 = vadd.xlane.f32.xlu0 %v1712
        %v1888 = vpop.xlane.xlu0 %1887
        %1889 = vadd.xlane.f32.xlu0 %v1714
        %v1890 = vpop.xlane.xlu0 %1889
        %vm1891 = vcmask 7168
        %1892 = vst.msk [vmem:[%s360] sm:$0xff] %vm1891, %v1828
        %1893 = vst.msk [vmem:[%s360 + $0x8] sm:$0xff] %vm1891, %v1830
        %1894 = vst.msk [vmem:[%s360 + $0x10] sm:$0xff] %vm1891, %v1832
        %1895 = vst.msk [vmem:[%s360 + $0x18] sm:$0xff] %vm1891, %v1834
        %1896 = vst.msk [vmem:[%s360 + $0x20] sm:$0xff] %vm1891, %v1836
        %1897 = vst.msk [vmem:[%s360 + $0x28] sm:$0xff] %vm1891, %v1838
        %1898 = vst.msk [vmem:[%s360 + $0x30] sm:$0xff] %vm1891, %v1840
        %1899 = vst.msk [vmem:[%s360 + $0x38] sm:$0xff] %vm1891, %v1842
        %1900 = vst.msk [vmem:[%s360 + $0x40] sm:$0xff] %vm1891, %v1844
        %1901 = vst.msk [vmem:[%s360 + $0x48] sm:$0xff] %vm1891, %v1846
        %1902 = vst.msk [vmem:[%s360 + $0x50] sm:$0xff] %vm1891, %v1848
        %1903 = vst.msk [vmem:[%s360 + $0x58] sm:$0xff] %vm1891, %v1850
        %1904 = vst.msk [vmem:[%s360 + $0x60] sm:$0xff] %vm1891, %v1852
        %1905 = vst.msk [vmem:[%s360 + $0x68] sm:$0xff] %vm1891, %v1854
        %1906 = vst.msk [vmem:[%s360 + $0x70] sm:$0xff] %vm1891, %v1856
        %1907 = vst.msk [vmem:[%s360 + $0x78] sm:$0xff] %vm1891, %v1858
        %1908 = vst.msk [vmem:[%s360 + $0x80] sm:$0xff] %vm1891, %v1860
        %1909 = vst.msk [vmem:[%s360 + $0x88] sm:$0xff] %vm1891, %v1862
        %1910 = vst.msk [vmem:[%s360 + $0x90] sm:$0xff] %vm1891, %v1864
        %1911 = vst.msk [vmem:[%s360 + $0x98] sm:$0xff] %vm1891, %v1866
        %1912 = vst.msk [vmem:[%s360 + $0xa0] sm:$0xff] %vm1891, %v1868
        %1913 = vst.msk [vmem:[%s360 + $0xa8] sm:$0xff] %vm1891, %v1870
        %1914 = vst.msk [vmem:[%s360 + $0xb0] sm:$0xff] %vm1891, %v1872
        %1915 = vst.msk [vmem:[%s360 + $0xb8] sm:$0xff] %vm1891, %v1874
        %1916 = vst.msk [vmem:[%s360 + $0xc0] sm:$0xff] %vm1891, %v1876
        %1917 = vst.msk [vmem:[%s360 + $0xc8] sm:$0xff] %vm1891, %v1878
        %1918 = vst.msk [vmem:[%s360 + $0xd0] sm:$0xff] %vm1891, %v1880
        %1919 = vst.msk [vmem:[%s360 + $0xd8] sm:$0xff] %vm1891, %v1882
        %1920 = vst.msk [vmem:[%s360 + $0xe0] sm:$0xff] %vm1891, %v1884
        %1921 = vst.msk [vmem:[%s360 + $0xe8] sm:$0xff] %vm1891, %v1886
        %1922 = vst.msk [vmem:[%s360 + $0xf0] sm:$0xff] %vm1891, %v1888
        %1923 = vst.msk [vmem:[%s360 + $0xf8] sm:$0xff] %vm1891, %v1890
        %s1924 = smul.u32 %s28, 128
        %s1925 = smul.u32 %s29, 256
        %s1926 = sadd.s32 %s1924, 128
        %p1927 = scmp.lt.s32.totalorder %s1925, %s1926
        %s1928 = sadd.s32 %s1925, 256
        %p1929 = scmp.gt.s32.totalorder %s1928, %s1924
        %p1930 = pnand %p1927, %p1929
        %p1931 = pneg %p1930
        // Predicated region
        $region41: #{tpu_custom_call.1} parent=35 // pred_check
          _
        $region42: #{tpu_custom_call.1} parent=35 // pred_check_branch
          %1933 = sbr.rel (%p1930) target = $region44
        $region43: #{tpu_custom_call.1} parent=35 // pred_region
          %v1934 = vlaneseq
          %v1935 = vshrl.u32 %v1934, 7
          %v1936 = vadd.s32 %v1935, 8
          %v1937 = vadd.s32 %v1935, 16
          %v1938 = vadd.s32 %v1935, 24
          %v1939 = vadd.s32 %v1935, 32
          %v1940 = vadd.s32 %v1935, 40
          %v1941 = vadd.s32 %v1935, 48
          %v1942 = vadd.s32 %v1935, 56
          %v1943 = vadd.s32 %v1935, 64
          %v1944 = vadd.s32 %v1935, 72
          %v1945 = vadd.s32 %v1935, 80
          %v1946 = vadd.s32 %v1935, 88
          %v1947 = vadd.s32 %v1935, 96
          %v1948 = vadd.s32 %v1935, 104
          %v1949 = vadd.s32 %v1935, 112
          %v1950 = vadd.s32 %v1935, 120
          %v1951 = vadd.s32 %v1935, 128
          %v1952 = vadd.s32 %v1935, 136
          %v1953 = vadd.s32 %v1935, 144
          %v1954 = vadd.s32 %v1935, 152
          %v1955 = vadd.s32 %v1935, 160
          %v1956 = vadd.s32 %v1935, 168
          %v1957 = vadd.s32 %v1935, 176
          %v1958 = vadd.s32 %v1935, 184
          %v1959 = vadd.s32 %v1935, 192
          %v1960 = vadd.s32 %v1935, 200
          %v1961 = vadd.s32 %v1935, 208
          %v1962 = vadd.s32 %v1935, 216
          %v1963 = vadd.s32 %v1935, 224
          %v1964 = vadd.s32 %v1935, 232
          %v1965 = vadd.s32 %v1935, 240
          %v1966 = vadd.s32 %v1935, 248
          %v1967 = vstv %s1925
          %v1968 = vadd.s32 %v1967, %v1935
          %v1969 = vadd.s32 %v1967, %v1936
          %v1970 = vadd.s32 %v1967, %v1937
          %v1971 = vadd.s32 %v1967, %v1938
          %v1972 = vadd.s32 %v1967, %v1939
          %v1973 = vadd.s32 %v1967, %v1940
          %v1974 = vadd.s32 %v1967, %v1941
          %v1975 = vadd.s32 %v1967, %v1942
          %v1976 = vadd.s32 %v1967, %v1943
          %v1977 = vadd.s32 %v1967, %v1944
          %v1978 = vadd.s32 %v1967, %v1945
          %v1979 = vadd.s32 %v1967, %v1946
          %v1980 = vadd.s32 %v1967, %v1947
          %v1981 = vadd.s32 %v1967, %v1948
          %v1982 = vadd.s32 %v1967, %v1949
          %v1983 = vadd.s32 %v1967, %v1950
          %v1984 = vadd.s32 %v1967, %v1951
          %v1985 = vadd.s32 %v1967, %v1952
          %v1986 = vadd.s32 %v1967, %v1953
          %v1987 = vadd.s32 %v1967, %v1954
          %v1988 = vadd.s32 %v1967, %v1955
          %v1989 = vadd.s32 %v1967, %v1956
          %v1990 = vadd.s32 %v1967, %v1957
          %v1991 = vadd.s32 %v1967, %v1958
          %v1992 = vadd.s32 %v1967, %v1959
          %v1993 = vadd.s32 %v1967, %v1960
          %v1994 = vadd.s32 %v1967, %v1961
          %v1995 = vadd.s32 %v1967, %v1962
          %v1996 = vadd.s32 %v1967, %v1963
          %v1997 = vadd.s32 %v1967, %v1964
          %v1998 = vadd.s32 %v1967, %v1965
          %v1999 = vadd.s32 %v1967, %v1966
          %v2000 = vlaneseq
          %v2001 = vand.u32 %v2000, 127
          %v2002 = vstv %s1924
          %v2003 = vadd.s32 %v2002, %v2001
          %vm2004 = vcmp.eq.s32.totalorder %v1968, %v2003
          %vm2005 = vcmp.eq.s32.totalorder %v1969, %v2003
          %vm2006 = vcmp.eq.s32.totalorder %v1970, %v2003
          %vm2007 = vcmp.eq.s32.totalorder %v1971, %v2003
          %vm2008 = vcmp.eq.s32.totalorder %v1972, %v2003
          %vm2009 = vcmp.eq.s32.totalorder %v1973, %v2003
          %vm2010 = vcmp.eq.s32.totalorder %v1974, %v2003
          %vm2011 = vcmp.eq.s32.totalorder %v1975, %v2003
          %vm2012 = vcmp.eq.s32.totalorder %v1976, %v2003
          %vm2013 = vcmp.eq.s32.totalorder %v1977, %v2003
          %vm2014 = vcmp.eq.s32.totalorder %v1978, %v2003
          %vm2015 = vcmp.eq.s32.totalorder %v1979, %v2003
          %vm2016 = vcmp.eq.s32.totalorder %v1980, %v2003
          %vm2017 = vcmp.eq.s32.totalorder %v1981, %v2003
          %vm2018 = vcmp.eq.s32.totalorder %v1982, %v2003
          %vm2019 = vcmp.eq.s32.totalorder %v1983, %v2003
          %vm2020 = vcmp.eq.s32.totalorder %v1984, %v2003
          %vm2021 = vcmp.eq.s32.totalorder %v1985, %v2003
          %vm2022 = vcmp.eq.s32.totalorder %v1986, %v2003
          %vm2023 = vcmp.eq.s32.totalorder %v1987, %v2003
          %vm2024 = vcmp.eq.s32.totalorder %v1988, %v2003
          %vm2025 = vcmp.eq.s32.totalorder %v1989, %v2003
          %vm2026 = vcmp.eq.s32.totalorder %v1990, %v2003
          %vm2027 = vcmp.eq.s32.totalorder %v1991, %v2003
          %vm2028 = vcmp.eq.s32.totalorder %v1992, %v2003
          %vm2029 = vcmp.eq.s32.totalorder %v1993, %v2003
          %vm2030 = vcmp.eq.s32.totalorder %v1994, %v2003
          %vm2031 = vcmp.eq.s32.totalorder %v1995, %v2003
          %vm2032 = vcmp.eq.s32.totalorder %v1996, %v2003
          %vm2033 = vcmp.eq.s32.totalorder %v1997, %v2003
          %vm2034 = vcmp.eq.s32.totalorder %v1998, %v2003
          %vm2035 = vcmp.eq.s32.totalorder %v1999, %v2003
          %v2036 = vsel %vm2004, 1, 0
          %v2037 = vsel %vm2005, 1, 0
          %v2038 = vsel %vm2006, 1, 0
          %v2039 = vsel %vm2007, 1, 0
          %v2040 = vsel %vm2008, 1, 0
          %v2041 = vsel %vm2009, 1, 0
          %v2042 = vsel %vm2010, 1, 0
          %v2043 = vsel %vm2011, 1, 0
          %v2044 = vsel %vm2012, 1, 0
          %v2045 = vsel %vm2013, 1, 0
          %v2046 = vsel %vm2014, 1, 0
          %v2047 = vsel %vm2015, 1, 0
          %v2048 = vsel %vm2016, 1, 0
          %v2049 = vsel %vm2017, 1, 0
          %v2050 = vsel %vm2018, 1, 0
          %v2051 = vsel %vm2019, 1, 0
          %v2052 = vsel %vm2020, 1, 0
          %v2053 = vsel %vm2021, 1, 0
          %v2054 = vsel %vm2022, 1, 0
          %v2055 = vsel %vm2023, 1, 0
          %v2056 = vsel %vm2024, 1, 0
          %v2057 = vsel %vm2025, 1, 0
          %v2058 = vsel %vm2026, 1, 0
          %v2059 = vsel %vm2027, 1, 0
          %v2060 = vsel %vm2028, 1, 0
          %v2061 = vsel %vm2029, 1, 0
          %v2062 = vsel %vm2030, 1, 0
          %v2063 = vsel %vm2031, 1, 0
          %v2064 = vsel %vm2032, 1, 0
          %v2065 = vsel %vm2033, 1, 0
          %v2066 = vsel %vm2034, 1, 0
          %v2067 = vsel %vm2035, 1, 0
          %v2068 = vcvt.s32.f32 %v2036
          %v2069 = vcvt.s32.f32 %v2037
          %v2070 = vcvt.s32.f32 %v2038
          %v2071 = vcvt.s32.f32 %v2039
          %v2072 = vcvt.s32.f32 %v2040
          %v2073 = vcvt.s32.f32 %v2041
          %v2074 = vcvt.s32.f32 %v2042
          %v2075 = vcvt.s32.f32 %v2043
          %v2076 = vcvt.s32.f32 %v2044
          %v2077 = vcvt.s32.f32 %v2045
          %v2078 = vcvt.s32.f32 %v2046
          %v2079 = vcvt.s32.f32 %v2047
          %v2080 = vcvt.s32.f32 %v2048
          %v2081 = vcvt.s32.f32 %v2049
          %v2082 = vcvt.s32.f32 %v2050
          %v2083 = vcvt.s32.f32 %v2051
          %v2084 = vcvt.s32.f32 %v2052
          %v2085 = vcvt.s32.f32 %v2053
          %v2086 = vcvt.s32.f32 %v2054
          %v2087 = vcvt.s32.f32 %v2055
          %v2088 = vcvt.s32.f32 %v2056
          %v2089 = vcvt.s32.f32 %v2057
          %v2090 = vcvt.s32.f32 %v2058
          %v2091 = vcvt.s32.f32 %v2059
          %v2092 = vcvt.s32.f32 %v2060
          %v2093 = vcvt.s32.f32 %v2061
          %v2094 = vcvt.s32.f32 %v2062
          %v2095 = vcvt.s32.f32 %v2063
          %v2096 = vcvt.s32.f32 %v2064
          %v2097 = vcvt.s32.f32 %v2065
          %v2098 = vcvt.s32.f32 %v2066
          %v2099 = vcvt.s32.f32 %v2067
          %v2100 = vld [vmem:[#allocation2] sm:$0x1]
          %v2101 = vmul.f32 %v866, %v2068
          %v2102 = vmul.f32 %v868, %v2069
          %v2103 = vmul.f32 %v870, %v2070
          %v2104 = vmul.f32 %v872, %v2071
          %v2105 = vmul.f32 %v874, %v2072
          %v2106 = vmul.f32 %v876, %v2073
          %v2107 = vmul.f32 %v878, %v2074
          %v2108 = vmul.f32 %v880, %v2075
          %v2109 = vmul.f32 %v882, %v2076
          %v2110 = vmul.f32 %v884, %v2077
          %v2111 = vmul.f32 %v886, %v2078
          %v2112 = vmul.f32 %v888, %v2079
          %v2113 = vmul.f32 %v890, %v2080
          %v2114 = vmul.f32 %v892, %v2081
          %v2115 = vmul.f32 %v894, %v2082
          %v2116 = vmul.f32 %v896, %v2083
          %v2117 = vmul.f32 %v898, %v2084
          %v2118 = vmul.f32 %v900, %v2085
          %v2119 = vmul.f32 %v902, %v2086
          %v2120 = vmul.f32 %v904, %v2087
          %v2121 = vmul.f32 %v906, %v2088
          %v2122 = vmul.f32 %v908, %v2089
          %v2123 = vmul.f32 %v910, %v2090
          %v2124 = vmul.f32 %v912, %v2091
          %v2125 = vmul.f32 %v914, %v2092
          %v2126 = vmul.f32 %v916, %v2093
          %v2127 = vmul.f32 %v918, %v2094
          %v2128 = vmul.f32 %v920, %v2095
          %v2129 = vmul.f32 %v922, %v2096
          %v2130 = vmul.f32 %v924, %v2097
          %v2131 = vmul.f32 %v926, %v2098
          %v2132 = vmul.f32 %v928, %v2099
          %v2133 = vadd.f32 %v2101, %v2102
          %v2134 = vadd.f32 %v2133, %v2103
          %v2135 = vadd.f32 %v2134, %v2104
          %v2136 = vadd.f32 %v2135, %v2105
          %v2137 = vadd.f32 %v2136, %v2106
          %v2138 = vadd.f32 %v2137, %v2107
          %v2139 = vadd.f32 %v2138, %v2108
          %v2140 = vadd.f32 %v2139, %v2109
          %v2141 = vadd.f32 %v2140, %v2110
          %v2142 = vadd.f32 %v2141, %v2111
          %v2143 = vadd.f32 %v2142, %v2112
          %v2144 = vadd.f32 %v2143, %v2113
          %v2145 = vadd.f32 %v2144, %v2114
          %v2146 = vadd.f32 %v2145, %v2115
          %v2147 = vadd.f32 %v2146, %v2116
          %v2148 = vadd.f32 %v2147, %v2117
          %v2149 = vadd.f32 %v2148, %v2118
          %v2150 = vadd.f32 %v2149, %v2119
          %v2151 = vadd.f32 %v2150, %v2120
          %v2152 = vadd.f32 %v2151, %v2121
          %v2153 = vadd.f32 %v2152, %v2122
          %v2154 = vadd.f32 %v2153, %v2123
          %v2155 = vadd.f32 %v2154, %v2124
          %v2156 = vadd.f32 %v2155, %v2125
          %v2157 = vadd.f32 %v2156, %v2126
          %v2158 = vadd.f32 %v2157, %v2127
          %v2159 = vadd.f32 %v2158, %v2128
          %v2160 = vadd.f32 %v2159, %v2129
          %v2161 = vadd.f32 %v2160, %v2130
          %v2162 = vadd.f32 %v2161, %v2131
          %v2163 = vadd.f32 %v2162, %v2132
          %v2164 = vrot.slane %v2163, 4
          %v2165 = vadd.f32 %v2163, %v2164
          %v2166 = vrot.slane %v2165, 2
          %v2167 = vadd.f32 %v2165, %v2166
          %v2168 = vrot.slane %v2167, 1
          %v2169 = vadd.f32 %v2167, %v2168
          %v2170 = vsub.f32 %v2100, %v2169
          %2171 = vst [vmem:[#allocation2] sm:$0x1] %v2170
          %v2172 = vld [vmem:[#allocation3] sm:$0x1]
          %v2173 = vmul.f32 %v1331, %v2068
          %v2174 = vmul.f32 %v1333, %v2069
          %v2175 = vmul.f32 %v1335, %v2070
          %v2176 = vmul.f32 %v1337, %v2071
          %v2177 = vmul.f32 %v1339, %v2072
          %v2178 = vmul.f32 %v1341, %v2073
          %v2179 = vmul.f32 %v1343, %v2074
          %v2180 = vmul.f32 %v1345, %v2075
          %v2181 = vmul.f32 %v1347, %v2076
          %v2182 = vmul.f32 %v1349, %v2077
          %v2183 = vmul.f32 %v1351, %v2078
          %v2184 = vmul.f32 %v1353, %v2079
          %v2185 = vmul.f32 %v1355, %v2080
          %v2186 = vmul.f32 %v1357, %v2081
          %v2187 = vmul.f32 %v1359, %v2082
          %v2188 = vmul.f32 %v1361, %v2083
          %v2189 = vmul.f32 %v1363, %v2084
          %v2190 = vmul.f32 %v1365, %v2085
          %v2191 = vmul.f32 %v1367, %v2086
          %v2192 = vmul.f32 %v1369, %v2087
          %v2193 = vmul.f32 %v1371, %v2088
          %v2194 = vmul.f32 %v1373, %v2089
          %v2195 = vmul.f32 %v1375, %v2090
          %v2196 = vmul.f32 %v1377, %v2091
          %v2197 = vmul.f32 %v1379, %v2092
          %v2198 = vmul.f32 %v1381, %v2093
          %v2199 = vmul.f32 %v1383, %v2094
          %v2200 = vmul.f32 %v1385, %v2095
          %v2201 = vmul.f32 %v1387, %v2096
          %v2202 = vmul.f32 %v1389, %v2097
          %v2203 = vmul.f32 %v1391, %v2098
          %v2204 = vmul.f32 %v1393, %v2099
          %v2205 = vadd.f32 %v2173, %v2174
          %v2206 = vadd.f32 %v2205, %v2175
          %v2207 = vadd.f32 %v2206, %v2176
          %v2208 = vadd.f32 %v2207, %v2177
          %v2209 = vadd.f32 %v2208, %v2178
          %v2210 = vadd.f32 %v2209, %v2179
          %v2211 = vadd.f32 %v2210, %v2180
          %v2212 = vadd.f32 %v2211, %v2181
          %v2213 = vadd.f32 %v2212, %v2182
          %v2214 = vadd.f32 %v2213, %v2183
          %v2215 = vadd.f32 %v2214, %v2184
          %v2216 = vadd.f32 %v2215, %v2185
          %v2217 = vadd.f32 %v2216, %v2186
          %v2218 = vadd.f32 %v2217, %v2187
          %v2219 = vadd.f32 %v2218, %v2188
          %v2220 = vadd.f32 %v2219, %v2189
          %v2221 = vadd.f32 %v2220, %v2190
          %v2222 = vadd.f32 %v2221, %v2191
          %v2223 = vadd.f32 %v2222, %v2192
          %v2224 = vadd.f32 %v2223, %v2193
          %v2225 = vadd.f32 %v2224, %v2194
          %v2226 = vadd.f32 %v2225, %v2195
          %v2227 = vadd.f32 %v2226, %v2196
          %v2228 = vadd.f32 %v2227, %v2197
          %v2229 = vadd.f32 %v2228, %v2198
          %v2230 = vadd.f32 %v2229, %v2199
          %v2231 = vadd.f32 %v2230, %v2200
          %v2232 = vadd.f32 %v2231, %v2201
          %v2233 = vadd.f32 %v2232, %v2202
          %v2234 = vadd.f32 %v2233, %v2203
          %v2235 = vadd.f32 %v2234, %v2204
          %v2236 = vrot.slane %v2235, 4
          %v2237 = vadd.f32 %v2235, %v2236
          %v2238 = vrot.slane %v2237, 2
          %v2239 = vadd.f32 %v2237, %v2238
          %v2240 = vrot.slane %v2239, 1
          %v2241 = vadd.f32 %v2239, %v2240
          %v2242 = vsub.f32 %v2172, %v2241
          %2243 = vst [vmem:[#allocation3] sm:$0x1] %v2242
        $region44: #{tpu_custom_call.1} parent=35 // pred_fallthru
          _
        // Predicated region
        $region45: #{tpu_custom_call.1} parent=35 // pred_check
          %p2244 = pneg %p361
        $region46: #{tpu_custom_call.1} parent=35 // pred_check_branch
          %2246 = sbr.rel (%p2244) target = $region48
        $region47: #{tpu_custom_call.1} parent=35 // pred_region
          %v2247 = vld [vmem:[#allocation2] sm:$0x1]
          %2248 = vst [vmem:[%s310] sm:$0x1] %v2247
          %v2249 = vld [vmem:[#allocation3] sm:$0x1]
          %2250 = vst [vmem:[%s316] sm:$0x1] %v2249
        $region48: #{tpu_custom_call.1} parent=35 // pred_fallthru
          _
        %s2251 = sand.u32 %s148, 1
        %s2252 = scalar_lea.sflag [#allocation5], %s2251
        %s2253 = sand.u32 %s148, 1
        %s2254 = scalar_lea.vmem [#allocation4], %s2253
        %s2255 = sand.u32 %s174, 1
        %s2256 = scalar_lea.sflag [#allocation7], %s2255
        %s2257 = sand.u32 %s174, 1
        %s2258 = scalar_lea.vmem [#allocation6], %s2257
        %p2259 = scmp.lt.s32.totalorder %s28, 1
        %s2260 = scalar_select %p2259, %s28, 1
        %p2261 = scmp.lt.s32.totalorder %s29, 0
        %s2262 = scalar_select %p2261, %s29, 0
        %s2263 = smul.addr %s2262, 32
        %s2264 = smul.addr %s2260, 32
        %s2265 = sadd.s32 %s2263, %s2264
        %s2266 = smul.addr %s2265, 8
        %s2267 = scalar_lea.vmem %s6, %s2266
        // Predicated region
        $region49: #{tpu_custom_call.1} parent=35 // pred_check
          %p2268 = pneg %p158
        $region50: #{tpu_custom_call.1} parent=35 // pred_check_branch
          %2270 = sbr.rel (%p2268) target = $region52
        $region51: #{tpu_custom_call.1} parent=35 // pred_region
          %s2272 = ssub.s32 16, 16
          %2273 = vsyncadd %s2252, %s2272
          %s2274 = smul.addr %s28, 16
          %s2275 = scalar_lea.hbm %s4, %s2274
          %s2277 = sshll.u32 %s2254, 4
          %s2278 = int_to_ptr.vmem [resolvable:$true] %s2277
          %2280 = dma.vmem_to_hbm [thread:$0]  %s2278, 16, %s2275, %s2252
        $region52: #{tpu_custom_call.1} parent=35 // pred_fallthru
          _
        // Predicated region
        $region53: #{tpu_custom_call.1} parent=35 // pred_check
          %p2281 = pneg %p184
        $region54: #{tpu_custom_call.1} parent=35 // pred_check_branch
          %2283 = sbr.rel (%p2281) target = $region56
        $region55: #{tpu_custom_call.1} parent=35 // pred_region
          %s2285 = ssub.s32 16, 16
          %2286 = vsyncadd %s2256, %s2285
          %s2287 = smul.addr %s28, 16
          %s2288 = scalar_lea.hbm %s5, %s2287
          %s2290 = sshll.u32 %s2258, 4
          %s2291 = int_to_ptr.vmem [resolvable:$true] %s2290
          %2293 = dma.vmem_to_hbm [thread:$0]  %s2291, 16, %s2288, %s2256
        $region56: #{tpu_custom_call.1} parent=35 // pred_fallthru
          _
        // Predicated region
        $region57: #{tpu_custom_call.1} parent=35 // pred_check
          %p2294 = pneg %p212
        $region58: #{tpu_custom_call.1} parent=35 // pred_check_branch
          %2296 = sbr.rel (%p2294) target = $region60
        $region59: #{tpu_custom_call.1} parent=35 // pred_region
          _
        $region60: #{tpu_custom_call.1} parent=35 // pred_fallthru
          _
      $region36: #{tpu_custom_call.1} parent=5 // pred_fallthru
        _
      %p2297 = scmp.le.s32.totalorder 2, %s19
      // Predicated region
      $region61: #{tpu_custom_call.1} parent=5 // pred_check
        %p2298 = pneg %p2297
      $region62: #{tpu_custom_call.1} parent=5 // pred_check_branch
        %2300 = sbr.rel (%p2298) target = $region64
      $region63: #{tpu_custom_call.1} parent=5 // pred_region
        %s2301 = ssub.s32 %s19, 2
        // Predicated region
        $region65: #{tpu_custom_call.1} parent=63 // pred_check
          %p2302 = pneg %p164
        $region66: #{tpu_custom_call.1} parent=63 // pred_check_branch
          %2304 = sbr.rel (%p2302) target = $region68
        $region67: #{tpu_custom_call.1} parent=63 // pred_region
          %s2305 = sand.u32 %s149, 1
          %s2306 = scalar_lea.sflag [#allocation5], %s2305
          %s2307 = sand.u32 %s149, 1
          %s2308 = scalar_lea.vmem [#allocation4], %s2307
          %2309 = dma.done %s2306, 16
        $region68: #{tpu_custom_call.1} parent=63 // pred_fallthru
          _
        // Predicated region
        $region69: #{tpu_custom_call.1} parent=63 // pred_check
          %p2310 = pneg %p190
        $region70: #{tpu_custom_call.1} parent=63 // pred_check_branch
          %2312 = sbr.rel (%p2310) target = $region72
        $region71: #{tpu_custom_call.1} parent=63 // pred_region
          %s2313 = sand.u32 %s175, 1
          %s2314 = scalar_lea.sflag [#allocation7], %s2313
          %s2315 = sand.u32 %s175, 1
          %s2316 = scalar_lea.vmem [#allocation6], %s2315
          %2317 = dma.done %s2314, 16
        $region72: #{tpu_custom_call.1} parent=63 // pred_fallthru
          _
        // Predicated region
        $region73: #{tpu_custom_call.1} parent=63 // pred_check
          %p2318 = pneg %p218
        $region74: #{tpu_custom_call.1} parent=63 // pred_check_branch
          %2320 = sbr.rel (%p2318) target = $region76
        $region75: #{tpu_custom_call.1} parent=63 // pred_region
          %p2321 = scmp.lt.s32.totalorder %s30, 1
          %s2322 = scalar_select %p2321, %s30, 1
          %p2323 = scmp.lt.s32.totalorder %s31, 0
          %s2324 = scalar_select %p2323, %s31, 0
          %s2325 = smul.addr %s2324, 32
          %s2326 = smul.addr %s2322, 32
          %s2327 = sadd.s32 %s2325, %s2326
          %s2328 = smul.addr %s2327, 8
          %s2329 = scalar_lea.vmem %s6, %s2328
        $region76: #{tpu_custom_call.1} parent=63 // pred_fallthru
          _
      $region64: #{tpu_custom_call.1} parent=5 // pred_fallthru
        _
    $region6: #{tpu_custom_call.1} parent=1 // loop_footer
      %s23 = sadd.s32 1, %s19
    $region7: #{tpu_custom_call.1} parent=1 // loop_footer_branch
      %18 = sbr.rel target = $region3
    $region8: #{tpu_custom_call.1} parent=1 // loop_exit
      _
    %2330 = vsyncpa [#allocation5], 1
    %s2331 = scalar_lea.sflag [#allocation5], 1
    %2332 = vsyncpa %s2331, 1
    %2333 = vsyncpa [#allocation7], 1
    %s2334 = scalar_lea.sflag [#allocation7], 1
    %2335 = vsyncpa %s2334, 1

</llo_original>
